<compile_context>
chip_gen: v7x
topology: tpu7x:2x2x1
jax: 0.10.0
libtpu: 0.0.40
codegen_flags: <defaults>
</compile_context>

<pallas_src>
import functools

import jax
import jax.numpy as jnp
from jax import lax
from jax.experimental import pallas as pl
from jax.experimental.pallas import tpu as pltpu

CONTEXT_LENGTH = 8
LN_EPS = 1e-5  # PyTorch nn.LayerNorm default
_VEC_ROWS = 8  # rows reserved at the top of the param slab for bias/LN vectors


def _layer_norm(h, gamma, beta):
    mean = jnp.mean(h, axis=-1, keepdims=True)
    cent = h - mean
    var = jnp.mean(cent * cent, axis=-1, keepdims=True)
    return cent * lax.rsqrt(var + LN_EPS) * gamma + beta


def _block_kernel(x_ref, p_ref, o_ref, *, seq_len, num_heads, head_size):
    N, C = x_ref.shape                 # N = block_b * T rows, C features
    T = seq_len
    bb = N // T
    hs = head_size

    # Row offsets inside the packed parameter slab (see pack_params()).
    W0 = _VEC_ROWS                     # [Wqkv | Wp]      rows W0 .. W0+C
    W1 = W0 + C                        # W_ff1            rows W1 .. W1+C
    W2 = W1 + C                        # W_ff2            rows W2 .. W2+4C

    # ---- bias / LayerNorm vectors (static ref slices, broadcast over rows) --
    ln1g = p_ref[0:1, 0:C]
    ln1b = p_ref[0:1, C:2 * C]
    ln2g = p_ref[0:1, 2 * C:3 * C]
    ln2b = p_ref[0:1, 3 * C:4 * C]
    bqkv = p_ref[1:2, 0:3 * C]
    bp   = p_ref[1:2, 3 * C:4 * C]
    b1   = p_ref[2:3, 0:4 * C]
    b2   = p_ref[3:4, 0:C]

    x = x_ref[...].astype(jnp.float32)

    # ---- LayerNorm 1 --------------------------------------------------------
    xn = _layer_norm(x, ln1g, ln1b)

    # ---- Fused QKV projection: Wqkv = [Wq*scale | Wk | Wv]  (C, 3C) ---------
    qkv = jnp.dot(xn, p_ref[W0:W0 + C, 0:3 * C],
                  preferred_element_type=jnp.float32) + bqkv
    qkv = qkv.reshape(bb, T, 3 * C)        # leading-dim split only

    # ---- Causal mask, built once --------------------------------------------
    row = lax.broadcasted_iota(jnp.int32, (T, T), 0)
    col = lax.broadcasted_iota(jnp.int32, (T, T), 1)
    keep = row >= col
    neg = jnp.float32(-1e30)               # large finite fill (no inf handling)

    # ---- Attention: batched over bb via einsum, short loop over heads;
    #      per-head output accumulated straight into the Wp projection. -------
    proj = jnp.zeros((N, C), jnp.float32)
    for h in range(num_heads):
        lo = h * hs
        q = qkv[:, :, lo:lo + hs]                          # (bb, T, hs)
        k = qkv[:, :, C + lo:C + lo + hs]
        v = qkv[:, :, 2 * C + lo:2 * C + lo + hs]

        s = jnp.einsum('btd,bud->btu', q, k,
                       preferred_element_type=jnp.float32)  # scale pre-folded
        s = jnp.where(keep, s, neg)
        s = s - jnp.max(s, axis=-1, keepdims=True)
        p = jnp.exp(s)
        p = p * pl.reciprocal(jnp.sum(p, axis=-1, keepdims=True), approx=False)
        # TODO(synk): attention-weight dropout (p=0.2) omitted (eval mode).

        o = jnp.einsum('btu,bud->btd', p, v,
                       preferred_element_type=jnp.float32)   # (bb, T, hs)
        # Wp row-slice is sublane aligned (hs = 8); no concatenate needed.
        proj = proj + jnp.dot(o.reshape(N, hs),
                              p_ref[W0 + lo:W0 + lo + hs, 3 * C:4 * C],
                              preferred_element_type=jnp.float32)
    attn = proj + bp

    # ---- Residual 1 (do1 = identity in eval mode) ---------------------------
    y = x + attn

    # ---- LayerNorm 2 + FeedForward (hidden = 4C = 128 lanes: lane-dense) ----
    yn = _layer_norm(y, ln2g, ln2b)
    h1 = jnp.dot(yn, p_ref[W1:W1 + C, 0:4 * C],
                 preferred_element_type=jnp.float32) + b1
    h1 = jnp.maximum(h1, 0.0)
    h2 = jnp.dot(h1, p_ref[W2:W2 + 4 * C, 0:C],
                 preferred_element_type=jnp.float32) + b2

    # ---- Residual 2 (do2 = identity in eval mode) ---------------------------
    o_ref[...] = (y + h2).astype(o_ref.dtype)


def block_forward(x, param_slab, *, num_heads, head_size, block_b=None):
    """x: (B, T, C) float32.  param_slab: (8 + 6C, max(4C,128)) from pack_params()."""
    B, T, C = x.shape
    assert C == num_heads * head_size
    N = B * T

    if block_b is None:
        # Single grid step by default: v5e/v6e have one TensorCore (a grid is a
        # serial loop there) and on v7x the per-step work at this size is far
        # smaller than the cross-TC sharding overhead.  Pass block_b < B only
        # when per-step work is several us and >= 2 TCs are available.
        block_b = B
    assert B % block_b == 0
    grid = (B // block_b,)
    rows = block_b * T

    R, LANE = param_slab.shape
    kernel = functools.partial(_block_kernel, seq_len=T,
                               num_heads=num_heads, head_size=head_size)

    out = pl.pallas_call(
        kernel,
        out_shape=jax.ShapeDtypeStruct((N, C), x.dtype),
        grid=grid,
        in_specs=[
            pl.BlockSpec((rows, C), lambda i: (i, 0)),    # activations
            pl.BlockSpec((R, LANE), lambda i: (0, 0)),    # packed param slab
        ],
        out_specs=pl.BlockSpec((rows, C), lambda i: (i, 0)),
        compiler_params=pltpu.CompilerParams(
            dimension_semantics=("parallel",)),
    )(x.reshape(N, C), param_slab)
    return out.reshape(B, T, C)


def init_params(key, num_heads, head_size):
    """Natural (unpacked) params, mimicking nn.Linear / nn.LayerNorm init."""
    C = num_heads * head_size
    keys = jax.random.split(key, 16)
    k_in = 1.0 / jnp.sqrt(C)
    k_hid = 1.0 / jnp.sqrt(4 * C)

    def u(k, shape, bound):
        return jax.random.uniform(k, shape, jnp.float32, -bound, bound)

    return {
        # per-head Linears stacked column-wise into (C, C); y = x @ W + b
        "wq": u(keys[0], (C, C), k_in), "bq": u(keys[3], (1, C), k_in),
        "wk": u(keys[1], (C, C), k_in), "bk": u(keys[4], (1, C), k_in),
        "wv": u(keys[2], (C, C), k_in), "bv": u(keys[5], (1, C), k_in),
        "wp": u(keys[6], (C, C), k_in), "bp": u(keys[7], (1, C), k_in),
        "w1": u(keys[8], (C, 4 * C), k_in), "b1": u(keys[9], (1, 4 * C), k_in),
        "w2": u(keys[10], (4 * C, C), k_hid), "b2": u(keys[11], (1, C), k_hid),
        "ln1_g": 1.0 + u(keys[12], (1, C), 0.1), "ln1_b": u(keys[13], (1, C), 0.1),
        "ln2_g": 1.0 + u(keys[14], (1, C), 0.1), "ln2_b": u(keys[15], (1, C), 0.1),
    }


def pack_params(p, *, head_size):
    """Pack every weight/bias/LN param into one contiguous f32 slab.

    Layout (LANE = max(4C, 128) lanes wide):
      row 0      : [ln1_g | ln1_b | ln2_g | ln2_b]
      row 1      : [bqkv (3C, scale folded into bq) | bp]
      row 2      : [b_ff1 (4C)]
      row 3      : [b_ff2 (C) | 0]
      rows 4..7  : zero padding (sublane alignment)
      rows 8..8+C        : [Wqkv (C,3C) | Wp (C,C)]
      next C rows        : W_ff1 (C,4C)
      next 4C rows       : W_ff2 (4C,C) zero-padded to LANE
    """
    C = p["wq"].shape[0]
    scale = head_size ** (-0.5)
    LANE = max(4 * C, 128)

    wqkv = jnp.concatenate([p["wq"] * scale, p["wk"], p["wv"]], axis=1)  # (C, 3C)
    bqkv = jnp.concatenate([p["bq"] * scale, p["bk"], p["bv"]], axis=1)  # (1, 3C)

    def pad_lanes(a):
        return jnp.pad(a, ((0, 0), (0, LANE - a.shape[1])))

    vec = jnp.zeros((_VEC_ROWS, LANE), jnp.float32)
    vec = vec.at[0, :4 * C].set(jnp.concatenate(
        [p["ln1_g"], p["ln1_b"], p["ln2_g"], p["ln2_b"]], axis=1)[0])
    vec = vec.at[1, :4 * C].set(jnp.concatenate([bqkv, p["bp"]], axis=1)[0])
    vec = vec.at[2, :4 * C].set(p["b1"][0])
    vec = vec.at[3, :C].set(p["b2"][0])

    slab = jnp.concatenate(
        [vec,
         pad_lanes(jnp.concatenate([wqkv, p["wp"]], axis=1)),   # (C, LANE)
         pad_lanes(p["w1"]),                                    # (C, LANE)
         pad_lanes(p["w2"])],                                   # (4C, LANE)
        axis=0).astype(jnp.float32)
    return slab


def _reference(x, p, num_heads, head_size):
    """Pure-JAX mirror of the PyTorch Block forward (eval mode)."""
    T = x.shape[1]

    def ln(h, g, b):
        m = h.mean(-1, keepdims=True)
        v = ((h - m) ** 2).mean(-1, keepdims=True)
        return (h - m) / jnp.sqrt(v + LN_EPS) * g + b

    xn = ln(x, p["ln1_g"], p["ln1_b"])
    q = xn @ p["wq"] + p["bq"]
    k = xn @ p["wk"] + p["bk"]
    v = xn @ p["wv"] + p["bv"]
    mask = jnp.tril(jnp.ones((T, T), bool))
    outs = []
    for h in range(num_heads):
        sl = slice(h * head_size, (h + 1) * head_size)
        wei = (q[..., sl] @ jnp.swapaxes(k[..., sl], -1, -2)) * head_size ** (-0.5)
        wei = jnp.where(mask, wei, -jnp.inf)
        wei = jax.nn.softmax(wei, axis=-1)
        outs.append(wei @ v[..., sl])
    attn = jnp.concatenate(outs, axis=-1) @ p["wp"] + p["bp"]
    y = x + attn
    yn = ln(y, p["ln2_g"], p["ln2_b"])
    ff = jnp.maximum(yn @ p["w1"] + p["b1"], 0.0) @ p["w2"] + p["b2"]
    return y + ff


if __name__ == "__main__":
    num_heads = 4
    head_size = 8
    B, T, C = 2, CONTEXT_LENGTH, num_heads * head_size

    key = jax.random.PRNGKey(0)
    kx, kp = jax.random.split(key)
    x = jax.random.normal(kx, (B, T, C), jnp.float32)
    params = init_params(kp, num_heads, head_size)
    slab = pack_params(params, head_size=head_size)

    out = block_forward(x, slab, num_heads=num_heads, head_size=head_size)
    out = jax.block_until_ready(out)

    ref = _reference(x, params, num_heads, head_size)
    assert out.shape == (B, T, C)
    # Exact softmax reciprocal now (approx=False), so tolerance is tightened;
    # remaining diffs are pure f32 reassociation (fused QKV, folded scale).
    assert jnp.allclose(out, ref, atol=1e-4, rtol=1e-4), (
        float(jnp.max(jnp.abs(out - ref))))

    print("KERNEL_OK")
</pallas_src>

<mosaic_0001>
module attributes {stable_mosaic.version = 11 : i64} {
  func.func @_block_kernel(%arg0: i32, %arg1: memref<16x32xf32, #tpu.memory_space<vmem>>, %arg2: memref<200x128xf32, #tpu.memory_space<vmem>>, %arg3: memref<16x32xf32, #tpu.memory_space<vmem>>) attributes {dimension_semantics = [#tpu.dimension_semantics<parallel>], iteration_bounds = array<i64: 1>, scalar_prefetch = 0 : i64, scratch_operands = 0 : i64, tpu.core_type = #tpu.core_type<tc>, window_params = [{transform_indices = @transform_0, window_bounds = array<i64: 16, 32>}, {pipeline_mode = #tpu.pipeline_mode<synchronous>, transform_indices = @transform_1, window_bounds = array<i64: 200, 128>}, {transform_indices = @transform_2, window_bounds = array<i64: 16, 32>}]} {
    %c0 = arith.constant 0 : index
    %c0_0 = arith.constant 0 : index
    %0 = vector.load %arg2[%c0, %c0_0] : memref<200x128xf32, #tpu.memory_space<vmem>>, vector<1x32xf32>
    %c0_1 = arith.constant 0 : index
    %c32 = arith.constant 32 : index
    %1 = vector.load %arg2[%c0_1, %c32] : memref<200x128xf32, #tpu.memory_space<vmem>>, vector<1x32xf32>
    %c0_2 = arith.constant 0 : index
    %c64 = arith.constant 64 : index
    %2 = vector.load %arg2[%c0_2, %c64] : memref<200x128xf32, #tpu.memory_space<vmem>>, vector<1x32xf32>
    %c0_3 = arith.constant 0 : index
    %c96 = arith.constant 96 : index
    %3 = vector.load %arg2[%c0_3, %c96] : memref<200x128xf32, #tpu.memory_space<vmem>>, vector<1x32xf32>
    %c1 = arith.constant 1 : index
    %c0_4 = arith.constant 0 : index
    %4 = vector.load %arg2[%c1, %c0_4] : memref<200x128xf32, #tpu.memory_space<vmem>>, vector<1x96xf32>
    %c1_5 = arith.constant 1 : index
    %c96_6 = arith.constant 96 : index
    %5 = vector.load %arg2[%c1_5, %c96_6] : memref<200x128xf32, #tpu.memory_space<vmem>>, vector<1x32xf32>
    %c2 = arith.constant 2 : index
    %c0_7 = arith.constant 0 : index
    %6 = vector.load %arg2[%c2, %c0_7] : memref<200x128xf32, #tpu.memory_space<vmem>>, vector<1x128xf32>
    %c3 = arith.constant 3 : index
    %c0_8 = arith.constant 0 : index
    %7 = vector.load %arg2[%c3, %c0_8] : memref<200x128xf32, #tpu.memory_space<vmem>>, vector<1x32xf32>
    %c0_9 = arith.constant 0 : index
    %c0_10 = arith.constant 0 : index
    %8 = vector.load %arg1[%c0_9, %c0_10] : memref<16x32xf32, #tpu.memory_space<vmem>>, vector<16x32xf32>
    %cst = arith.constant dense<0.000000e+00> : vector<16xf32>
    %9 = vector.multi_reduction <add>, %8, %cst [1] : vector<16x32xf32> to vector<16xf32>
    %10 = vector.shape_cast %9 : vector<16xf32> to vector<16x1xf32>
    %cst_11 = arith.constant 3.200000e+01 : f32
    %11 = vector.broadcast %cst_11 : f32 to vector<16x1xf32>
    %12 = arith.divf %10, %11 : vector<16x1xf32>
    %13 = vector.broadcast %12 : vector<16x1xf32> to vector<16x32xf32>
    %14 = arith.subf %8, %13 : vector<16x32xf32>
    %15 = arith.mulf %14, %14 : vector<16x32xf32>
    %cst_12 = arith.constant dense<0.000000e+00> : vector<16xf32>
    %16 = vector.multi_reduction <add>, %15, %cst_12 [1] : vector<16x32xf32> to vector<16xf32>
    %17 = vector.shape_cast %16 : vector<16xf32> to vector<16x1xf32>
    %cst_13 = arith.constant 3.200000e+01 : f32
    %18 = vector.broadcast %cst_13 : f32 to vector<16x1xf32>
    %19 = arith.divf %17, %18 : vector<16x1xf32>
    %cst_14 = arith.constant 9.99999974E-6 : f32
    %20 = vector.broadcast %cst_14 : f32 to vector<16x1xf32>
    %21 = arith.addf %19, %20 : vector<16x1xf32>
    %22 = math.rsqrt %21 : vector<16x1xf32>
    %23 = vector.broadcast %22 : vector<16x1xf32> to vector<16x32xf32>
    %24 = arith.mulf %14, %23 : vector<16x32xf32>
    %25 = vector.broadcast %0 : vector<1x32xf32> to vector<16x32xf32>
    %26 = arith.mulf %24, %25 : vector<16x32xf32>
    %27 = vector.broadcast %1 : vector<1x32xf32> to vector<16x32xf32>
    %28 = arith.addf %26, %27 : vector<16x32xf32>
    %c8 = arith.constant 8 : index
    %c0_15 = arith.constant 0 : index
    %29 = vector.load %arg2[%c8, %c0_15] : memref<200x128xf32, #tpu.memory_space<vmem>>, vector<32x96xf32>
    %cst_16 = arith.constant dense<0.000000e+00> : vector<16x96xf32>
    %30 = tpu.matmul %28, %29, %cst_16 {dimension_numbers = #tpu.dot_dimension_numbers<[1], [0], [0], [1], [0, 0, 1, 1], [], []>} : vector<16x32xf32>, vector<32x96xf32>, vector<16x96xf32> -> vector<16x96xf32>
    %31 = vector.broadcast %4 : vector<1x96xf32> to vector<16x96xf32>
    %32 = arith.addf %30, %31 : vector<16x96xf32>
    %33 = vector.shape_cast %32 : vector<16x96xf32> to vector<2x8x96xf32>
    %34 = tpu.iota {dimensions = array<i32: 0>} : vector<8x8xi32>
    %35 = tpu.iota {dimensions = array<i32: 1>} : vector<8x8xi32>
    %36 = arith.cmpi sge, %34, %35 : vector<8x8xi32>
    %cst_17 = arith.constant 0.000000e+00 : f32
    %37 = vector.broadcast %cst_17 : f32 to vector<16x32xf32>
    %38 = vector.extract_strided_slice %33 {offsets = [0, 0, 0], sizes = [2, 8, 8], strides = [1, 1, 1]} : vector<2x8x96xf32> to vector<2x8x8xf32>
    %39 = vector.extract_strided_slice %33 {offsets = [0, 0, 32], sizes = [2, 8, 8], strides = [1, 1, 1]} : vector<2x8x96xf32> to vector<2x8x8xf32>
    %40 = vector.extract_strided_slice %33 {offsets = [0, 0, 64], sizes = [2, 8, 8], strides = [1, 1, 1]} : vector<2x8x96xf32> to vector<2x8x8xf32>
    "tpu.trace_start"() <{level = 10 : i32, message = "btd,bud->btu"}> : () -> ()
    %cst_18 = arith.constant dense<0.000000e+00> : vector<2x8x8xf32>
    %41 = tpu.matmul %38, %39, %cst_18 {dimension_numbers = #tpu.dot_dimension_numbers<[2], [2], [1], [1], [0, 0, 0, 1, 1, 1], [0], [0]>} : vector<2x8x8xf32>, vector<2x8x8xf32>, vector<2x8x8xf32> -> vector<2x8x8xf32>
    %cst_19 = arith.constant -1.000000e+30 : f32
    "tpu.trace_stop"() : () -> ()
    %42 = vector.shape_cast %36 : vector<8x8xi1> to vector<1x8x8xi1>
    %43 = vector.broadcast %42 : vector<1x8x8xi1> to vector<2x8x8xi1>
    %44 = vector.broadcast %cst_19 : f32 to vector<2x8x8xf32>
    %45 = arith.select %43, %41, %44 : vector<2x8x8xi1>, vector<2x8x8xf32>
    %cst_20 = arith.constant dense<0xFF800000> : vector<2x8xf32>
    %46 = vector.multi_reduction <maximumf>, %45, %cst_20 [2] : vector<2x8x8xf32> to vector<2x8xf32>
    %47 = vector.shape_cast %46 : vector<2x8xf32> to vector<2x8x1xf32>
    %48 = vector.broadcast %47 : vector<2x8x1xf32> to vector<2x8x8xf32>
    %49 = arith.subf %45, %48 : vector<2x8x8xf32>
    %50 = math.exp %49 : vector<2x8x8xf32>
    %cst_21 = arith.constant dense<0.000000e+00> : vector<2x8xf32>
    %51 = vector.multi_reduction <add>, %50, %cst_21 [2] : vector<2x8x8xf32> to vector<2x8xf32>
    %52 = vector.shape_cast %51 : vector<2x8xf32> to vector<2x8x1xf32>
    %53 = tpu.reciprocal %52 : vector<2x8x1xf32> -> vector<2x8x1xf32>
    %54 = vector.broadcast %53 : vector<2x8x1xf32> to vector<2x8x8xf32>
    %55 = arith.mulf %50, %54 : vector<2x8x8xf32>
    "tpu.trace_start"() <{level = 10 : i32, message = "btu,bud->btd"}> : () -> ()
    %cst_22 = arith.constant dense<0.000000e+00> : vector<2x8x8xf32>
    %56 = tpu.matmul %55, %40, %cst_22 {dimension_numbers = #tpu.dot_dimension_numbers<[2], [1], [1], [2], [0, 0, 0, 1, 1, 2], [0], [0]>} : vector<2x8x8xf32>, vector<2x8x8xf32>, vector<2x8x8xf32> -> vector<2x8x8xf32>
    "tpu.trace_stop"() : () -> ()
    %57 = vector.shape_cast %56 : vector<2x8x8xf32> to vector<16x8xf32>
    %c8_23 = arith.constant 8 : index
    %c96_24 = arith.constant 96 : index
    %58 = vector.load %arg2[%c8_23, %c96_24] : memref<200x128xf32, #tpu.memory_space<vmem>>, vector<8x32xf32>
    %cst_25 = arith.constant dense<0.000000e+00> : vector<16x32xf32>
    %59 = tpu.matmul %57, %58, %cst_25 {dimension_numbers = #tpu.dot_dimension_numbers<[1], [0], [0], [1], [0, 0, 1, 1], [], []>} : vector<16x8xf32>, vector<8x32xf32>, vector<16x32xf32> -> vector<16x32xf32>
    %60 = arith.addf %37, %59 : vector<16x32xf32>
    %61 = vector.extract_strided_slice %33 {offsets = [0, 0, 8], sizes = [2, 8, 8], strides = [1, 1, 1]} : vector<2x8x96xf32> to vector<2x8x8xf32>
    %62 = vector.extract_strided_slice %33 {offsets = [0, 0, 40], sizes = [2, 8, 8], strides = [1, 1, 1]} : vector<2x8x96xf32> to vector<2x8x8xf32>
    %63 = vector.extract_strided_slice %33 {offsets = [0, 0, 72], sizes = [2, 8, 8], strides = [1, 1, 1]} : vector<2x8x96xf32> to vector<2x8x8xf32>
    "tpu.trace_start"() <{level = 10 : i32, message = "btd,bud->btu"}> : () -> ()
    %cst_26 = arith.constant dense<0.000000e+00> : vector<2x8x8xf32>
    %64 = tpu.matmul %61, %62, %cst_26 {dimension_numbers = #tpu.dot_dimension_numbers<[2], [2], [1], [1], [0, 0, 0, 1, 1, 1], [0], [0]>} : vector<2x8x8xf32>, vector<2x8x8xf32>, vector<2x8x8xf32> -> vector<2x8x8xf32>
    %cst_27 = arith.constant -1.000000e+30 : f32
    "tpu.trace_stop"() : () -> ()
    %65 = vector.shape_cast %36 : vector<8x8xi1> to vector<1x8x8xi1>
    %66 = vector.broadcast %65 : vector<1x8x8xi1> to vector<2x8x8xi1>
    %67 = vector.broadcast %cst_27 : f32 to vector<2x8x8xf32>
    %68 = arith.select %66, %64, %67 : vector<2x8x8xi1>, vector<2x8x8xf32>
    %cst_28 = arith.constant dense<0xFF800000> : vector<2x8xf32>
    %69 = vector.multi_reduction <maximumf>, %68, %cst_28 [2] : vector<2x8x8xf32> to vector<2x8xf32>
    %70 = vector.shape_cast %69 : vector<2x8xf32> to vector<2x8x1xf32>
    %71 = vector.broadcast %70 : vector<2x8x1xf32> to vector<2x8x8xf32>
    %72 = arith.subf %68, %71 : vector<2x8x8xf32>
    %73 = math.exp %72 : vector<2x8x8xf32>
    %cst_29 = arith.constant dense<0.000000e+00> : vector<2x8xf32>
    %74 = vector.multi_reduction <add>, %73, %cst_29 [2] : vector<2x8x8xf32> to vector<2x8xf32>
    %75 = vector.shape_cast %74 : vector<2x8xf32> to vector<2x8x1xf32>
    %76 = tpu.reciprocal %75 : vector<2x8x1xf32> -> vector<2x8x1xf32>
    %77 = vector.broadcast %76 : vector<2x8x1xf32> to vector<2x8x8xf32>
    %78 = arith.mulf %73, %77 : vector<2x8x8xf32>
    "tpu.trace_start"() <{level = 10 : i32, message = "btu,bud->btd"}> : () -> ()
    %cst_30 = arith.constant dense<0.000000e+00> : vector<2x8x8xf32>
    %79 = tpu.matmul %78, %63, %cst_30 {dimension_numbers = #tpu.dot_dimension_numbers<[2], [1], [1], [2], [0, 0, 0, 1, 1, 2], [0], [0]>} : vector<2x8x8xf32>, vector<2x8x8xf32>, vector<2x8x8xf32> -> vector<2x8x8xf32>
    "tpu.trace_stop"() : () -> ()
    %80 = vector.shape_cast %79 : vector<2x8x8xf32> to vector<16x8xf32>
    %c16 = arith.constant 16 : index
    %c96_31 = arith.constant 96 : index
    %81 = vector.load %arg2[%c16, %c96_31] : memref<200x128xf32, #tpu.memory_space<vmem>>, vector<8x32xf32>
    %cst_32 = arith.constant dense<0.000000e+00> : vector<16x32xf32>
    %82 = tpu.matmul %80, %81, %cst_32 {dimension_numbers = #tpu.dot_dimension_numbers<[1], [0], [0], [1], [0, 0, 1, 1], [], []>} : vector<16x8xf32>, vector<8x32xf32>, vector<16x32xf32> -> vector<16x32xf32>
    %83 = arith.addf %60, %82 : vector<16x32xf32>
    %84 = vector.extract_strided_slice %33 {offsets = [0, 0, 16], sizes = [2, 8, 8], strides = [1, 1, 1]} : vector<2x8x96xf32> to vector<2x8x8xf32>
    %85 = vector.extract_strided_slice %33 {offsets = [0, 0, 48], sizes = [2, 8, 8], strides = [1, 1, 1]} : vector<2x8x96xf32> to vector<2x8x8xf32>
    %86 = vector.extract_strided_slice %33 {offsets = [0, 0, 80], sizes = [2, 8, 8], strides = [1, 1, 1]} : vector<2x8x96xf32> to vector<2x8x8xf32>
    "tpu.trace_start"() <{level = 10 : i32, message = "btd,bud->btu"}> : () -> ()
    %cst_33 = arith.constant dense<0.000000e+00> : vector<2x8x8xf32>
    %87 = tpu.matmul %84, %85, %cst_33 {dimension_numbers = #tpu.dot_dimension_numbers<[2], [2], [1], [1], [0, 0, 0, 1, 1, 1], [0], [0]>} : vector<2x8x8xf32>, vector<2x8x8xf32>, vector<2x8x8xf32> -> vector<2x8x8xf32>
    %cst_34 = arith.constant -1.000000e+30 : f32
    "tpu.trace_stop"() : () -> ()
    %88 = vector.shape_cast %36 : vector<8x8xi1> to vector<1x8x8xi1>
    %89 = vector.broadcast %88 : vector<1x8x8xi1> to vector<2x8x8xi1>
    %90 = vector.broadcast %cst_34 : f32 to vector<2x8x8xf32>
    %91 = arith.select %89, %87, %90 : vector<2x8x8xi1>, vector<2x8x8xf32>
    %cst_35 = arith.constant dense<0xFF800000> : vector<2x8xf32>
    %92 = vector.multi_reduction <maximumf>, %91, %cst_35 [2] : vector<2x8x8xf32> to vector<2x8xf32>
    %93 = vector.shape_cast %92 : vector<2x8xf32> to vector<2x8x1xf32>
    %94 = vector.broadcast %93 : vector<2x8x1xf32> to vector<2x8x8xf32>
    %95 = arith.subf %91, %94 : vector<2x8x8xf32>
    %96 = math.exp %95 : vector<2x8x8xf32>
    %cst_36 = arith.constant dense<0.000000e+00> : vector<2x8xf32>
    %97 = vector.multi_reduction <add>, %96, %cst_36 [2] : vector<2x8x8xf32> to vector<2x8xf32>
    %98 = vector.shape_cast %97 : vector<2x8xf32> to vector<2x8x1xf32>
    %99 = tpu.reciprocal %98 : vector<2x8x1xf32> -> vector<2x8x1xf32>
    %100 = vector.broadcast %99 : vector<2x8x1xf32> to vector<2x8x8xf32>
    %101 = arith.mulf %96, %100 : vector<2x8x8xf32>
    "tpu.trace_start"() <{level = 10 : i32, message = "btu,bud->btd"}> : () -> ()
    %cst_37 = arith.constant dense<0.000000e+00> : vector<2x8x8xf32>
    %102 = tpu.matmul %101, %86, %cst_37 {dimension_numbers = #tpu.dot_dimension_numbers<[2], [1], [1], [2], [0, 0, 0, 1, 1, 2], [0], [0]>} : vector<2x8x8xf32>, vector<2x8x8xf32>, vector<2x8x8xf32> -> vector<2x8x8xf32>
    "tpu.trace_stop"() : () -> ()
    %103 = vector.shape_cast %102 : vector<2x8x8xf32> to vector<16x8xf32>
    %c24 = arith.constant 24 : index
    %c96_38 = arith.constant 96 : index
    %104 = vector.load %arg2[%c24, %c96_38] : memref<200x128xf32, #tpu.memory_space<vmem>>, vector<8x32xf32>
    %cst_39 = arith.constant dense<0.000000e+00> : vector<16x32xf32>
    %105 = tpu.matmul %103, %104, %cst_39 {dimension_numbers = #tpu.dot_dimension_numbers<[1], [0], [0], [1], [0, 0, 1, 1], [], []>} : vector<16x8xf32>, vector<8x32xf32>, vector<16x32xf32> -> vector<16x32xf32>
    %106 = arith.addf %83, %105 : vector<16x32xf32>
    %107 = vector.extract_strided_slice %33 {offsets = [0, 0, 24], sizes = [2, 8, 8], strides = [1, 1, 1]} : vector<2x8x96xf32> to vector<2x8x8xf32>
    %108 = vector.extract_strided_slice %33 {offsets = [0, 0, 56], sizes = [2, 8, 8], strides = [1, 1, 1]} : vector<2x8x96xf32> to vector<2x8x8xf32>
    %109 = vector.extract_strided_slice %33 {offsets = [0, 0, 88], sizes = [2, 8, 8], strides = [1, 1, 1]} : vector<2x8x96xf32> to vector<2x8x8xf32>
    "tpu.trace_start"() <{level = 10 : i32, message = "btd,bud->btu"}> : () -> ()
    %cst_40 = arith.constant dense<0.000000e+00> : vector<2x8x8xf32>
    %110 = tpu.matmul %107, %108, %cst_40 {dimension_numbers = #tpu.dot_dimension_numbers<[2], [2], [1], [1], [0, 0, 0, 1, 1, 1], [0], [0]>} : vector<2x8x8xf32>, vector<2x8x8xf32>, vector<2x8x8xf32> -> vector<2x8x8xf32>
    %cst_41 = arith.constant -1.000000e+30 : f32
    "tpu.trace_stop"() : () -> ()
    %111 = vector.shape_cast %36 : vector<8x8xi1> to vector<1x8x8xi1>
    %112 = vector.broadcast %111 : vector<1x8x8xi1> to vector<2x8x8xi1>
    %113 = vector.broadcast %cst_41 : f32 to vector<2x8x8xf32>
    %114 = arith.select %112, %110, %113 : vector<2x8x8xi1>, vector<2x8x8xf32>
    %cst_42 = arith.constant dense<0xFF800000> : vector<2x8xf32>
    %115 = vector.multi_reduction <maximumf>, %114, %cst_42 [2] : vector<2x8x8xf32> to vector<2x8xf32>
    %116 = vector.shape_cast %115 : vector<2x8xf32> to vector<2x8x1xf32>
    %117 = vector.broadcast %116 : vector<2x8x1xf32> to vector<2x8x8xf32>
    %118 = arith.subf %114, %117 : vector<2x8x8xf32>
    %119 = math.exp %118 : vector<2x8x8xf32>
    %cst_43 = arith.constant dense<0.000000e+00> : vector<2x8xf32>
    %120 = vector.multi_reduction <add>, %119, %cst_43 [2] : vector<2x8x8xf32> to vector<2x8xf32>
    %121 = vector.shape_cast %120 : vector<2x8xf32> to vector<2x8x1xf32>
    %122 = tpu.reciprocal %121 : vector<2x8x1xf32> -> vector<2x8x1xf32>
    %123 = vector.broadcast %122 : vector<2x8x1xf32> to vector<2x8x8xf32>
    %124 = arith.mulf %119, %123 : vector<2x8x8xf32>
    "tpu.trace_start"() <{level = 10 : i32, message = "btu,bud->btd"}> : () -> ()
    %cst_44 = arith.constant dense<0.000000e+00> : vector<2x8x8xf32>
    %125 = tpu.matmul %124, %109, %cst_44 {dimension_numbers = #tpu.dot_dimension_numbers<[2], [1], [1], [2], [0, 0, 0, 1, 1, 2], [0], [0]>} : vector<2x8x8xf32>, vector<2x8x8xf32>, vector<2x8x8xf32> -> vector<2x8x8xf32>
    "tpu.trace_stop"() : () -> ()
    %126 = vector.shape_cast %125 : vector<2x8x8xf32> to vector<16x8xf32>
    %c32_45 = arith.constant 32 : index
    %c96_46 = arith.constant 96 : index
    %127 = vector.load %arg2[%c32_45, %c96_46] : memref<200x128xf32, #tpu.memory_space<vmem>>, vector<8x32xf32>
    %cst_47 = arith.constant dense<0.000000e+00> : vector<16x32xf32>
    %128 = tpu.matmul %126, %127, %cst_47 {dimension_numbers = #tpu.dot_dimension_numbers<[1], [0], [0], [1], [0, 0, 1, 1], [], []>} : vector<16x8xf32>, vector<8x32xf32>, vector<16x32xf32> -> vector<16x32xf32>
    %129 = arith.addf %106, %128 : vector<16x32xf32>
    %130 = vector.broadcast %5 : vector<1x32xf32> to vector<16x32xf32>
    %131 = arith.addf %129, %130 : vector<16x32xf32>
    %132 = arith.addf %8, %131 : vector<16x32xf32>
    %cst_48 = arith.constant dense<0.000000e+00> : vector<16xf32>
    %133 = vector.multi_reduction <add>, %132, %cst_48 [1] : vector<16x32xf32> to vector<16xf32>
    %134 = vector.shape_cast %133 : vector<16xf32> to vector<16x1xf32>
    %cst_49 = arith.constant 3.200000e+01 : f32
    %135 = vector.broadcast %cst_49 : f32 to vector<16x1xf32>
    %136 = arith.divf %134, %135 : vector<16x1xf32>
    %137 = vector.broadcast %136 : vector<16x1xf32> to vector<16x32xf32>
    %138 = arith.subf %132, %137 : vector<16x32xf32>
    %139 = arith.mulf %138, %138 : vector<16x32xf32>
    %cst_50 = arith.constant dense<0.000000e+00> : vector<16xf32>
    %140 = vector.multi_reduction <add>, %139, %cst_50 [1] : vector<16x32xf32> to vector<16xf32>
    %141 = vector.shape_cast %140 : vector<16xf32> to vector<16x1xf32>
    %cst_51 = arith.constant 3.200000e+01 : f32
    %142 = vector.broadcast %cst_51 : f32 to vector<16x1xf32>
    %143 = arith.divf %141, %142 : vector<16x1xf32>
    %cst_52 = arith.constant 9.99999974E-6 : f32
    %144 = vector.broadcast %cst_52 : f32 to vector<16x1xf32>
    %145 = arith.addf %143, %144 : vector<16x1xf32>
    %146 = math.rsqrt %145 : vector<16x1xf32>
    %147 = vector.broadcast %146 : vector<16x1xf32> to vector<16x32xf32>
    %148 = arith.mulf %138, %147 : vector<16x32xf32>
    %149 = vector.broadcast %2 : vector<1x32xf32> to vector<16x32xf32>
    %150 = arith.mulf %148, %149 : vector<16x32xf32>
    %151 = vector.broadcast %3 : vector<1x32xf32> to vector<16x32xf32>
    %152 = arith.addf %150, %151 : vector<16x32xf32>
    %c40 = arith.constant 40 : index
    %c0_53 = arith.constant 0 : index
    %153 = vector.load %arg2[%c40, %c0_53] : memref<200x128xf32, #tpu.memory_space<vmem>>, vector<32x128xf32>
    %cst_54 = arith.constant dense<0.000000e+00> : vector<16x128xf32>
    %154 = tpu.matmul %152, %153, %cst_54 {dimension_numbers = #tpu.dot_dimension_numbers<[1], [0], [0], [1], [0, 0, 1, 1], [], []>} : vector<16x32xf32>, vector<32x128xf32>, vector<16x128xf32> -> vector<16x128xf32>
    %155 = vector.broadcast %6 : vector<1x128xf32> to vector<16x128xf32>
    %156 = arith.addf %154, %155 : vector<16x128xf32>
    %cst_55 = arith.constant 0.000000e+00 : f32
    %157 = vector.broadcast %cst_55 : f32 to vector<16x128xf32>
    %158 = arith.maximumf %156, %157 : vector<16x128xf32>
    %c72 = arith.constant 72 : index
    %c0_56 = arith.constant 0 : index
    %159 = vector.load %arg2[%c72, %c0_56] : memref<200x128xf32, #tpu.memory_space<vmem>>, vector<128x32xf32>
    %cst_57 = arith.constant dense<0.000000e+00> : vector<16x32xf32>
    %160 = tpu.matmul %158, %159, %cst_57 {dimension_numbers = #tpu.dot_dimension_numbers<[1], [0], [0], [1], [0, 0, 1, 1], [], []>} : vector<16x128xf32>, vector<128x32xf32>, vector<16x32xf32> -> vector<16x32xf32>
    %161 = vector.broadcast %7 : vector<1x32xf32> to vector<16x32xf32>
    %162 = arith.addf %160, %161 : vector<16x32xf32>
    %163 = arith.addf %132, %162 : vector<16x32xf32>
    %c0_58 = arith.constant 0 : index
    %c0_59 = arith.constant 0 : index
    %164 = vector.load %arg3[%c0_58, %c0_59] : memref<16x32xf32, #tpu.memory_space<vmem>>, vector<16x32xf32>
    tpu.vector_store %arg3[%c0_58, %c0_59], %163 {strides = array<i32>} : memref<16x32xf32, #tpu.memory_space<vmem>>, vector<16x32xf32>,
    return
  }
  func.func @transform_0(%arg0: i32) -> (i32, i32) {
    %c0_i32 = arith.constant 0 : i32
    %c0_i32_0 = arith.constant 0 : i32
    return %arg0, %c0_i32 : i32, i32
  }
  func.func @transform_1(%arg0: i32) -> (i32, i32) {
    %c0_i32 = arith.constant 0 : i32
    %c0_i32_0 = arith.constant 0 : i32
    %c0_i32_1 = arith.constant 0 : i32
    return %c0_i32, %c0_i32_0 : i32, i32
  }
  func.func @transform_2(%arg0: i32) -> (i32, i32) {
    %c0_i32 = arith.constant 0 : i32
    %c0_i32_0 = arith.constant 0 : i32
    return %arg0, %c0_i32 : i32, i32
  }
}

</mosaic_0001>

<llo_original>
// kernel: tpu_custom_call.1
$region0: #{tpu_custom_call.1}
  #allocation0 [shape = 'u32[]', space=smem, size = 0x4, offset = 0x4, fixed_abs, tag = 'smem constant byte address 0x4 - core index']
  #allocation1 [shape = 'u32[144,128]{1,0:T(1,128)}', space=vmem, size = 0x12000, scoped, tag = 'internal scratch']
  %s0 = inlined_call_operand.hbm [shape: f32[16,32], index: 0, kind: input, shape index: {}]
  %s1 = inlined_call_operand.hbm [shape: f32[200,128], index: 1, kind: input, shape index: {}]
  %s2 = inlined_call_operand.hbm [shape: f32[16,32], index: 2, kind: output, shape index: {}]
  %s3 = sld [smem:[#allocation0]]
  $region26: #{tpu_custom_call.1} parent=0
    _
  %s5 = ssub.s32 1, %s3
  %s6 = scalar_select 0, %s5, %s3
  $region1: #{tpu_custom_call.1} parent=0
    #allocation2 [shape = 'u8[8192]{0}', space=vmem, size = 0x2000, scoped, tag = 'input window, operand 0, single buffered']
    #allocation3 [shape = 's32[1]{0}', space=sflag, size = 0x4, scoped, tag = 'scoped memory for tpu_custom_call.1']
    #allocation4 [shape = 's32[1]{0}', space=sflag, size = 0x4, scoped, tag = 'scoped memory for tpu_custom_call.1']
    #allocation5 [shape = 'u8[102400]{0}', space=vmem, size = 0x19000, scoped, tag = 'input window, operand 1, single buffered']
    #allocation6 [shape = 's32[1]{0}', space=sflag, size = 0x4, scoped, tag = 'scoped memory for tpu_custom_call.1']
    #allocation7 [shape = 'u8[8192]{0}', space=vmem, size = 0x2000, scoped, tag = 'output window, operand 0, single buffered']
    %7 = vsyncpa [#allocation3], 0
    %8 = vsyncpa [#allocation6], 0
    %9 = vsyncpa [#allocation4], 0
    // Predicated region
    $region2: #{tpu_custom_call.1} parent=1 // pred_check
      _
    $region3: #{tpu_custom_call.1} parent=1 // pred_check_branch
      %11 = sbr.rel (0) target = $region5
    $region4: #{tpu_custom_call.1} parent=1 // pred_region
      %s13 = ssub.s32 256, 256
      %14 = vsyncadd [#allocation3], %s13
      %s15 = sshll.u32 [#allocation2], 4
      %s16 = int_to_ptr.vmem [resolvable:$true] %s15
      %21 = dma.hbm_to_vmem [thread:$0]  %s0, 256, %s16, [#allocation3], 128, 128, 8
    $region5: #{tpu_custom_call.1} parent=1 // pred_fallthru
      _
    // Predicated region
    $region6: #{tpu_custom_call.1} parent=1 // pred_check
      _
    $region7: #{tpu_custom_call.1} parent=1 // pred_check_branch
      %23 = sbr.rel (0) target = $region9
    $region8: #{tpu_custom_call.1} parent=1 // pred_region
      %s25 = ssub.s32 3200, 3200
      %26 = vsyncadd [#allocation6], %s25
      %s27 = sshll.u32 [#allocation5], 4
      %s28 = int_to_ptr.vmem [resolvable:$true] %s27
      %33 = dma.hbm_to_vmem [thread:$0]  %s1, 3200, %s28, [#allocation6], 128, 128, 8
    $region9: #{tpu_custom_call.1} parent=1 // pred_fallthru
      _
    // Predicated region
    $region10: #{tpu_custom_call.1} parent=1 // pred_check
      _
    $region11: #{tpu_custom_call.1} parent=1 // pred_check_branch
      %35 = sbr.rel (0) target = $region13
    $region12: #{tpu_custom_call.1} parent=1 // pred_region
      %36 = dma.done [#allocation3], 256
    $region13: #{tpu_custom_call.1} parent=1 // pred_fallthru
      _
    // Predicated region
    $region14: #{tpu_custom_call.1} parent=1 // pred_check
      _
    $region15: #{tpu_custom_call.1} parent=1 // pred_check_branch
      %38 = sbr.rel (0) target = $region17
    $region16: #{tpu_custom_call.1} parent=1 // pred_region
      %39 = dma.done [#allocation6], 3200
    $region17: #{tpu_custom_call.1} parent=1 // pred_fallthru
      _
    %v40 = vld [vmem:[#allocation5] sm:$0x1]
    %v41 = vld [vmem:[#allocation5 + $0x1] sm:$0x1]
    %v42 = vld [vmem:[#allocation5 + $0x2] sm:$0x1]
    %v43 = vld [vmem:[#allocation5 + $0x3] sm:$0x1]
    %v44 = vld [vmem:[#allocation2] sm:$0xff]
    %v45 = vld [vmem:[#allocation2 + $0x8] sm:$0xff]
    %vm46 = vcmask 261120
    %v47 = vsel %vm46, %v44, 0.0
    %48 = vadd.xlane.f32.xlu0 %v47
    %v49 = vpop.xlane.xlu0 %48
    %v50 = vsel %vm46, %v45, 0.0
    %51 = vadd.xlane.f32.xlu0 %v50
    %v52 = vpop.xlane.xlu0 %51
    %v53 = vrcp.pop 32.0
    %v54 = vmul.f32 %v49, %v53
    %v55 = vmul.f32 %v52, %v53
    %v56 = vsub.f32 %v44, %v54
    %v57 = vsub.f32 %v45, %v55
    %v58 = vmul.f32 %v56, %v56
    %v59 = vmul.f32 %v57, %v57
    %v60 = vsel %vm46, %v58, 0.0
    %61 = vadd.xlane.f32.xlu0 %v60
    %v62 = vpop.xlane.xlu0 %61
    %v63 = vsel %vm46, %v59, 0.0
    %64 = vadd.xlane.f32.xlu0 %v63
    %v65 = vpop.xlane.xlu0 %64
    %v66 = vmul.f32 %v62, %v53
    %v67 = vmul.f32 %v65, %v53
    %v68 = vadd.f32 %v66, 1e-05
    %v69 = vadd.f32 %v67, 1e-05
    %v70 = vrsqrt.pop %v68
    %v71 = vrsqrt.pop %v69
    %v72 = vmul.f32 %v56, %v70
    %v73 = vmul.f32 %v57, %v71
    %v74 = vlaneseq
    %v75 = vshrl.u32 %v74, 7
    %v76 = vsub.s32 0, %v75
    %v77 = vrot.slane %v40, %v76
    %v78 = vmul.f32 %v72, %v77
    %v79 = vmul.f32 %v73, %v77
    %81 = vrot.lane.b32.xlu0 %v77, 96
    %v82 = vpop.permute.xlu0 %81
    %v84 = vadd.f32 %v78, %v82
    %v85 = vadd.f32 %v79, %v82
    %v86 = vld [vmem:[#allocation5 + $0x8] sm:$0xff]
    %v87 = vld [vmem:[#allocation5 + $0x10] sm:$0xff]
    %v88 = vld [vmem:[#allocation5 + $0x18] sm:$0xff]
    %v89 = vld [vmem:[#allocation5 + $0x20] sm:$0xff]
    %v90 = vlaneseq
    %v91 = vshrl.u32 %v90, 7
    %v92 = vsub.s32 0, %v91
    %v93 = vrot.slane %v41, %v92
    %v95 = vsel %vm46, %v84, 0
    %v98 = vsel %vm46, %v85, 0
    %100 = vmatprep.subr.mxu0 0.0
    %101 = vmatpush1.msra.mxu0 %v86
    %102 = vmatprep.subr.mxu0 0.0
    %103 = vmatpush1.msra.mxu0 %v87
    %104 = vmatprep.subr.mxu0 0.0
    %105 = vmatpush1.msra.mxu0 %v88
    %106 = vmatprep.subr.mxu0 0.0
    %107 = vmatpush1.msra.mxu0 %v89
    %108 = vmatprep.subr.mxu0 0.0
    %109 = vmatpush1.msra.mxu0 0.0
    %110 = vmatprep.subr.mxu0 0.0
    %111 = vmatpush1.msra.mxu0 0.0
    %112 = vmatprep.subr.mxu0 0.0
    %113 = vmatpush1.msra.mxu0 0.0
    %114 = vmatprep.subr.mxu0 0.0
    %115 = vmatpush1.msra.mxu0 0.0
    %116 = vmatprep.subr.mxu0 0.0
    %117 = vmatpush1.msra.mxu0 0.0
    %118 = vmatprep.subr.mxu0 0.0
    %119 = vmatpush1.msra.mxu0 0.0
    %120 = vmatprep.subr.mxu0 0.0
    %121 = vmatpush1.msra.mxu0 0.0
    %122 = vmatprep.subr.mxu0 0.0
    %123 = vmatpush1.msra.mxu0 0.0
    %124 = vmatprep.subr.mxu0 0.0
    %125 = vmatpush1.msra.mxu0 0.0
    %126 = vmatprep.subr.mxu0 0.0
    %127 = vmatpush1.msra.mxu0 0.0
    %128 = vmatprep.subr.mxu0 0.0
    %129 = vmatpush1.msra.mxu0 0.0
    %130 = vmatprep.subr.mxu0 0.0
    %131 = vmatpush1.msra.mxu0 0.0
    %132 = vmatprep.subr.mxu0 0.0
    %133 = vmatpush1.msra.mxu0 0.0
    %134 = vmatprep.subr.mxu0 0.0
    %135 = vmatpush1.msra.mxu0 0.0
    %136 = vmatprep.subr.mxu0 0.0
    %137 = vmatpush1.msra.mxu0 0.0
    %138 = vmatprep.subr.mxu0 0.0
    %139 = vmatpush1.msra.mxu0 0.0
    %140 = vmatprep.subr.mxu0 0.0
    %141 = vmatpush1.msra.mxu0 0.0
    %142 = vmatprep.subr.mxu0 0.0
    %143 = vmatpush1.msra.mxu0 0.0
    %144 = vmatprep.subr.mxu0 0.0
    %145 = vmatpush1.msra.mxu0 0.0
    %146 = vmatprep.subr.mxu0 0.0
    %147 = vmatpush1.msra.mxu0 0.0
    %148 = vmatprep.subr.mxu0 0.0
    %149 = vmatpush1.msra.mxu0 0.0
    %150 = vmatprep.subr.mxu0 0.0
    %151 = vmatpush1.msra.mxu0 0.0
    %152 = vmatprep.subr.mxu0 0.0
    %153 = vmatpush1.msra.mxu0 0.0
    %154 = vmatprep.subr.mxu0 0.0
    %155 = vmatpush1.msra.mxu0 0.0
    %156 = vmatprep.subr.mxu0 0.0
    %157 = vmatpush1.msra.mxu0 0.0
    %158 = vmatprep.subr.mxu0 0.0
    %159 = vmatpush1.msra.mxu0 0.0
    %160 = vmatprep.subr.mxu0 0.0
    %161 = vmatpush1.msra.mxu0 0.0
    %162 = vmatprep.subr.mxu0 0.0
    %163 = vmatpush1.msra.mxu0 0.0
    %164 = vmatprep.mubr.f32.mxu0 0.0
    %165 = vmatmul.mubr.f32.gmra.mrb[0].mxu0 %v95
    %v166 = vpop.f32.mrb[0].mxu0
    %v167 = vadd.f32 %v93, %v166
    %v168 = vpop.f32.mrb[0].mxu0
    %169 = vmatprep.mubr.f32.mxu0 0.0
    %170 = vmatmul.mubr.f32.gmra.mrb[0].mxu0 %v98
    %v171 = vpop.f32.mrb[0].mxu0
    %v172 = vadd.f32 %v93, %v171
    %v173 = vpop.f32.mrb[0].mxu0
    %174 = vdwg.mxu0
    %v175 = vlaneseq
    %v176 = vshrl.u32 %v175, 7
    %v177 = vlaneseq
    %v178 = vand.u32 %v177, 127
    %vm179 = vcmp.ge.s32.totalorder %v176, %v178
    %181 = vrot.lane.b32.xlu0 %v167, 96
    %v182 = vpop.permute.xlu0 %181
    %vm183 = vcmask 64512
    %v184 = vsel %vm183, %v167, 0
    %v186 = vsel %vm183, %v182, 0
    %188 = vmatprep.subr.mxu0 0.0
    %189 = vmatpush1.xpose.msra.mxu0 %v186
    %190 = vmatprep.subr.mxu0 0.0
    %191 = vmatpush1.xpose.msra.mxu0 0.0
    %192 = vmatprep.subr.mxu0 0.0
    %193 = vmatpush1.xpose.msra.mxu0 0.0
    %194 = vmatprep.subr.mxu0 0.0
    %195 = vmatpush1.xpose.msra.mxu0 0.0
    %196 = vmatprep.subr.mxu0 0.0
    %197 = vmatpush1.xpose.msra.mxu0 0.0
    %198 = vmatprep.subr.mxu0 0.0
    %199 = vmatpush1.xpose.msra.mxu0 0.0
    %200 = vmatprep.subr.mxu0 0.0
    %201 = vmatpush1.xpose.msra.mxu0 0.0
    %202 = vmatprep.subr.mxu0 0.0
    %203 = vmatpush1.xpose.msra.mxu0 0.0
    %204 = vmatprep.subr.mxu0 0.0
    %205 = vmatpush1.xpose.msra.mxu0 0.0
    %206 = vmatprep.subr.mxu0 0.0
    %207 = vmatpush1.xpose.msra.mxu0 0.0
    %208 = vmatprep.subr.mxu0 0.0
    %209 = vmatpush1.xpose.msra.mxu0 0.0
    %210 = vmatprep.subr.mxu0 0.0
    %211 = vmatpush1.xpose.msra.mxu0 0.0
    %212 = vmatprep.subr.mxu0 0.0
    %213 = vmatpush1.xpose.msra.mxu0 0.0
    %214 = vmatprep.subr.mxu0 0.0
    %215 = vmatpush1.xpose.msra.mxu0 0.0
    %216 = vmatprep.subr.mxu0 0.0
    %217 = vmatpush1.xpose.msra.mxu0 0.0
    %218 = vmatprep.subr.mxu0 0.0
    %219 = vmatpush1.xpose.msra.mxu0 0.0
    %220 = vmatprep.subr.mxu0 0.0
    %221 = vmatpush1.xpose.msra.mxu0 0.0
    %222 = vmatprep.subr.mxu0 0.0
    %223 = vmatpush1.xpose.msra.mxu0 0.0
    %224 = vmatprep.subr.mxu0 0.0
    %225 = vmatpush1.xpose.msra.mxu0 0.0
    %226 = vmatprep.subr.mxu0 0.0
    %227 = vmatpush1.xpose.msra.mxu0 0.0
    %228 = vmatprep.subr.mxu0 0.0
    %229 = vmatpush1.xpose.msra.mxu0 0.0
    %230 = vmatprep.subr.mxu0 0.0
    %231 = vmatpush1.xpose.msra.mxu0 0.0
    %232 = vmatprep.subr.mxu0 0.0
    %233 = vmatpush1.xpose.msra.mxu0 0.0
    %234 = vmatprep.subr.mxu0 0.0
    %235 = vmatpush1.xpose.msra.mxu0 0.0
    %236 = vmatprep.subr.mxu0 0.0
    %237 = vmatpush1.xpose.msra.mxu0 0.0
    %238 = vmatprep.subr.mxu0 0.0
    %239 = vmatpush1.xpose.msra.mxu0 0.0
    %240 = vmatprep.subr.mxu0 0.0
    %241 = vmatpush1.xpose.msra.mxu0 0.0
    %242 = vmatprep.subr.mxu0 0.0
    %243 = vmatpush1.xpose.msra.mxu0 0.0
    %244 = vmatprep.subr.mxu0 0.0
    %245 = vmatpush1.xpose.msra.mxu0 0.0
    %246 = vmatprep.subr.mxu0 0.0
    %247 = vmatpush1.xpose.msra.mxu0 0.0
    %248 = vmatprep.subr.mxu0 0.0
    %249 = vmatpush1.xpose.msra.mxu0 0.0
    %250 = vmatprep.subr.mxu0 0.0
    %251 = vmatpush1.xpose.msra.mxu0 0.0
    %252 = vmatprep.mubr.f32.mxu0 0.0
    %253 = vmatmul.mubr.f32.gmra.mrb[0].mxu0 %v184
    %v254 = vpop.f32.mrb[0].mxu0
    %v255 = vadd.f32 0.0, %v254
    %v256 = vpop.f32.mrb[0].mxu0
    %257 = vdwg.mxu0
    %259 = vrot.lane.b32.xlu0 %v172, 96
    %v260 = vpop.permute.xlu0 %259
    %v261 = vsel %vm183, %v172, 0
    %v263 = vsel %vm183, %v260, 0
    %265 = vmatprep.subr.mxu0 0.0
    %266 = vmatpush1.xpose.msra.mxu0 %v263
    %267 = vmatprep.subr.mxu0 0.0
    %268 = vmatpush1.xpose.msra.mxu0 0.0
    %269 = vmatprep.subr.mxu0 0.0
    %270 = vmatpush1.xpose.msra.mxu0 0.0
    %271 = vmatprep.subr.mxu0 0.0
    %272 = vmatpush1.xpose.msra.mxu0 0.0
    %273 = vmatprep.subr.mxu0 0.0
    %274 = vmatpush1.xpose.msra.mxu0 0.0
    %275 = vmatprep.subr.mxu0 0.0
    %276 = vmatpush1.xpose.msra.mxu0 0.0
    %277 = vmatprep.subr.mxu0 0.0
    %278 = vmatpush1.xpose.msra.mxu0 0.0
    %279 = vmatprep.subr.mxu0 0.0
    %280 = vmatpush1.xpose.msra.mxu0 0.0
    %281 = vmatprep.subr.mxu0 0.0
    %282 = vmatpush1.xpose.msra.mxu0 0.0
    %283 = vmatprep.subr.mxu0 0.0
    %284 = vmatpush1.xpose.msra.mxu0 0.0
    %285 = vmatprep.subr.mxu0 0.0
    %286 = vmatpush1.xpose.msra.mxu0 0.0
    %287 = vmatprep.subr.mxu0 0.0
    %288 = vmatpush1.xpose.msra.mxu0 0.0
    %289 = vmatprep.subr.mxu0 0.0
    %290 = vmatpush1.xpose.msra.mxu0 0.0
    %291 = vmatprep.subr.mxu0 0.0
    %292 = vmatpush1.xpose.msra.mxu0 0.0
    %293 = vmatprep.subr.mxu0 0.0
    %294 = vmatpush1.xpose.msra.mxu0 0.0
    %295 = vmatprep.subr.mxu0 0.0
    %296 = vmatpush1.xpose.msra.mxu0 0.0
    %297 = vmatprep.subr.mxu0 0.0
    %298 = vmatpush1.xpose.msra.mxu0 0.0
    %299 = vmatprep.subr.mxu0 0.0
    %300 = vmatpush1.xpose.msra.mxu0 0.0
    %301 = vmatprep.subr.mxu0 0.0
    %302 = vmatpush1.xpose.msra.mxu0 0.0
    %303 = vmatprep.subr.mxu0 0.0
    %304 = vmatpush1.xpose.msra.mxu0 0.0
    %305 = vmatprep.subr.mxu0 0.0
    %306 = vmatpush1.xpose.msra.mxu0 0.0
    %307 = vmatprep.subr.mxu0 0.0
    %308 = vmatpush1.xpose.msra.mxu0 0.0
    %309 = vmatprep.subr.mxu0 0.0
    %310 = vmatpush1.xpose.msra.mxu0 0.0
    %311 = vmatprep.subr.mxu0 0.0
    %312 = vmatpush1.xpose.msra.mxu0 0.0
    %313 = vmatprep.subr.mxu0 0.0
    %314 = vmatpush1.xpose.msra.mxu0 0.0
    %315 = vmatprep.subr.mxu0 0.0
    %316 = vmatpush1.xpose.msra.mxu0 0.0
    %317 = vmatprep.subr.mxu0 0.0
    %318 = vmatpush1.xpose.msra.mxu0 0.0
    %319 = vmatprep.subr.mxu0 0.0
    %320 = vmatpush1.xpose.msra.mxu0 0.0
    %321 = vmatprep.subr.mxu0 0.0
    %322 = vmatpush1.xpose.msra.mxu0 0.0
    %323 = vmatprep.subr.mxu0 0.0
    %324 = vmatpush1.xpose.msra.mxu0 0.0
    %325 = vmatprep.subr.mxu0 0.0
    %326 = vmatpush1.xpose.msra.mxu0 0.0
    %327 = vmatprep.subr.mxu0 0.0
    %328 = vmatpush1.xpose.msra.mxu0 0.0
    %329 = vmatprep.mubr.f32.mxu0 0.0
    %330 = vmatmul.mubr.f32.gmra.mrb[0].mxu0 %v261
    %v331 = vpop.f32.mrb[0].mxu0
    %v332 = vadd.f32 0.0, %v331
    %v333 = vpop.f32.mrb[0].mxu0
    %334 = vdwg.mxu0
    %v335 = vsel %vm179, 1, 0
    %vm336 = vcmp.eq.s32.totalorder %v335, 1
    %v337 = vsel %vm336, %v255, -1e+30
    %v338 = vsel %vm336, %v332, -1e+30
    %v339 = vsel %vm183, %v337, -inf
    %340 = vmax.xlane.f32.xlu0 %v339
    %v341 = vpop.xlane.xlu0 %340
    %v342 = vsel %vm183, %v338, -inf
    %343 = vmax.xlane.f32.xlu0 %v342
    %v344 = vpop.xlane.xlu0 %343
    %v345 = vsub.f32 %v337, %v341
    %v346 = vsub.f32 %v338, %v344
    %v347 = vmul.f32 %v345, 1.442695
    %v348 = vpow.pop %v347
    %v349 = vmul.f32 %v346, 1.442695
    %v350 = vpow.pop %v349
    %v351 = vsel %vm183, %v348, 0.0
    %352 = vadd.xlane.f32.xlu0 %v351
    %v353 = vpop.xlane.xlu0 %352
    %v354 = vsel %vm183, %v350, 0.0
    %355 = vadd.xlane.f32.xlu0 %v354
    %v356 = vpop.xlane.xlu0 %355
    %v357 = vrcp.pop %v353
    %v358 = vrcp.pop %v356
    %v359 = vmul.f32 %v348, %v357
    %v360 = vmul.f32 %v350, %v358
    %361 = vrot.lane.b32.xlu0 %v167, 64
    %v362 = vpop.permute.xlu0 %361
    %v365 = vsel %vm183, %v359, 0
    %367 = vmatprep.subr.mxu0 0.0
    %368 = vmatpush1.msra.mxu0 %v362
    %369 = vmatprep.subr.mxu0 0.0
    %370 = vmatpush1.msra.mxu0 0.0
    %371 = vmatprep.subr.mxu0 0.0
    %372 = vmatpush1.msra.mxu0 0.0
    %373 = vmatprep.subr.mxu0 0.0
    %374 = vmatpush1.msra.mxu0 0.0
    %375 = vmatprep.subr.mxu0 0.0
    %376 = vmatpush1.msra.mxu0 0.0
    %377 = vmatprep.subr.mxu0 0.0
    %378 = vmatpush1.msra.mxu0 0.0
    %379 = vmatprep.subr.mxu0 0.0
    %380 = vmatpush1.msra.mxu0 0.0
    %381 = vmatprep.subr.mxu0 0.0
    %382 = vmatpush1.msra.mxu0 0.0
    %383 = vmatprep.subr.mxu0 0.0
    %384 = vmatpush1.msra.mxu0 0.0
    %385 = vmatprep.subr.mxu0 0.0
    %386 = vmatpush1.msra.mxu0 0.0
    %387 = vmatprep.subr.mxu0 0.0
    %388 = vmatpush1.msra.mxu0 0.0
    %389 = vmatprep.subr.mxu0 0.0
    %390 = vmatpush1.msra.mxu0 0.0
    %391 = vmatprep.subr.mxu0 0.0
    %392 = vmatpush1.msra.mxu0 0.0
    %393 = vmatprep.subr.mxu0 0.0
    %394 = vmatpush1.msra.mxu0 0.0
    %395 = vmatprep.subr.mxu0 0.0
    %396 = vmatpush1.msra.mxu0 0.0
    %397 = vmatprep.subr.mxu0 0.0
    %398 = vmatpush1.msra.mxu0 0.0
    %399 = vmatprep.subr.mxu0 0.0
    %400 = vmatpush1.msra.mxu0 0.0
    %401 = vmatprep.subr.mxu0 0.0
    %402 = vmatpush1.msra.mxu0 0.0
    %403 = vmatprep.subr.mxu0 0.0
    %404 = vmatpush1.msra.mxu0 0.0
    %405 = vmatprep.subr.mxu0 0.0
    %406 = vmatpush1.msra.mxu0 0.0
    %407 = vmatprep.subr.mxu0 0.0
    %408 = vmatpush1.msra.mxu0 0.0
    %409 = vmatprep.subr.mxu0 0.0
    %410 = vmatpush1.msra.mxu0 0.0
    %411 = vmatprep.subr.mxu0 0.0
    %412 = vmatpush1.msra.mxu0 0.0
    %413 = vmatprep.subr.mxu0 0.0
    %414 = vmatpush1.msra.mxu0 0.0
    %415 = vmatprep.subr.mxu0 0.0
    %416 = vmatpush1.msra.mxu0 0.0
    %417 = vmatprep.subr.mxu0 0.0
    %418 = vmatpush1.msra.mxu0 0.0
    %419 = vmatprep.subr.mxu0 0.0
    %420 = vmatpush1.msra.mxu0 0.0
    %421 = vmatprep.subr.mxu0 0.0
    %422 = vmatpush1.msra.mxu0 0.0
    %423 = vmatprep.subr.mxu0 0.0
    %424 = vmatpush1.msra.mxu0 0.0
    %425 = vmatprep.subr.mxu0 0.0
    %426 = vmatpush1.msra.mxu0 0.0
    %427 = vmatprep.subr.mxu0 0.0
    %428 = vmatpush1.msra.mxu0 0.0
    %429 = vmatprep.subr.mxu0 0.0
    %430 = vmatpush1.msra.mxu0 0.0
    %431 = vmatprep.mubr.f32.mxu0 0.0
    %432 = vmatmul.mubr.f32.gmra.mrb[0].mxu0 %v365
    %v433 = vpop.f32.mrb[0].mxu0
    %v434 = vadd.f32 0.0, %v433
    %v435 = vpop.f32.mrb[0].mxu0
    %436 = vdwg.mxu0
    %437 = vrot.lane.b32.xlu0 %v172, 64
    %v438 = vpop.permute.xlu0 %437
    %v441 = vsel %vm183, %v360, 0
    %443 = vmatprep.subr.mxu0 0.0
    %444 = vmatpush1.msra.mxu0 %v438
    %445 = vmatprep.subr.mxu0 0.0
    %446 = vmatpush1.msra.mxu0 0.0
    %447 = vmatprep.subr.mxu0 0.0
    %448 = vmatpush1.msra.mxu0 0.0
    %449 = vmatprep.subr.mxu0 0.0
    %450 = vmatpush1.msra.mxu0 0.0
    %451 = vmatprep.subr.mxu0 0.0
    %452 = vmatpush1.msra.mxu0 0.0
    %453 = vmatprep.subr.mxu0 0.0
    %454 = vmatpush1.msra.mxu0 0.0
    %455 = vmatprep.subr.mxu0 0.0
    %456 = vmatpush1.msra.mxu0 0.0
    %457 = vmatprep.subr.mxu0 0.0
    %458 = vmatpush1.msra.mxu0 0.0
    %459 = vmatprep.subr.mxu0 0.0
    %460 = vmatpush1.msra.mxu0 0.0
    %461 = vmatprep.subr.mxu0 0.0
    %462 = vmatpush1.msra.mxu0 0.0
    %463 = vmatprep.subr.mxu0 0.0
    %464 = vmatpush1.msra.mxu0 0.0
    %465 = vmatprep.subr.mxu0 0.0
    %466 = vmatpush1.msra.mxu0 0.0
    %467 = vmatprep.subr.mxu0 0.0
    %468 = vmatpush1.msra.mxu0 0.0
    %469 = vmatprep.subr.mxu0 0.0
    %470 = vmatpush1.msra.mxu0 0.0
    %471 = vmatprep.subr.mxu0 0.0
    %472 = vmatpush1.msra.mxu0 0.0
    %473 = vmatprep.subr.mxu0 0.0
    %474 = vmatpush1.msra.mxu0 0.0
    %475 = vmatprep.subr.mxu0 0.0
    %476 = vmatpush1.msra.mxu0 0.0
    %477 = vmatprep.subr.mxu0 0.0
    %478 = vmatpush1.msra.mxu0 0.0
    %479 = vmatprep.subr.mxu0 0.0
    %480 = vmatpush1.msra.mxu0 0.0
    %481 = vmatprep.subr.mxu0 0.0
    %482 = vmatpush1.msra.mxu0 0.0
    %483 = vmatprep.subr.mxu0 0.0
    %484 = vmatpush1.msra.mxu0 0.0
    %485 = vmatprep.subr.mxu0 0.0
    %486 = vmatpush1.msra.mxu0 0.0
    %487 = vmatprep.subr.mxu0 0.0
    %488 = vmatpush1.msra.mxu0 0.0
    %489 = vmatprep.subr.mxu0 0.0
    %490 = vmatpush1.msra.mxu0 0.0
    %491 = vmatprep.subr.mxu0 0.0
    %492 = vmatpush1.msra.mxu0 0.0
    %493 = vmatprep.subr.mxu0 0.0
    %494 = vmatpush1.msra.mxu0 0.0
    %495 = vmatprep.subr.mxu0 0.0
    %496 = vmatpush1.msra.mxu0 0.0
    %497 = vmatprep.subr.mxu0 0.0
    %498 = vmatpush1.msra.mxu0 0.0
    %499 = vmatprep.subr.mxu0 0.0
    %500 = vmatpush1.msra.mxu0 0.0
    %501 = vmatprep.subr.mxu0 0.0
    %502 = vmatpush1.msra.mxu0 0.0
    %503 = vmatprep.subr.mxu0 0.0
    %504 = vmatpush1.msra.mxu0 0.0
    %505 = vmatprep.subr.mxu0 0.0
    %506 = vmatpush1.msra.mxu0 0.0
    %507 = vmatprep.mubr.f32.mxu0 0.0
    %508 = vmatmul.mubr.f32.gmra.mrb[0].mxu0 %v441
    %v509 = vpop.f32.mrb[0].mxu0
    %v510 = vadd.f32 0.0, %v509
    %v511 = vpop.f32.mrb[0].mxu0
    %512 = vdwg.mxu0
    %v513 = vld [vmem:[#allocation5 + $0x8] sm:$0xff]
    %514 = vrot.lane.b32.xlu0 %v167, 120
    %v515 = vpop.permute.xlu0 %514
    %516 = vrot.lane.b32.xlu0 %v167, 88
    %v517 = vpop.permute.xlu0 %516
    %v518 = vsel %vm183, %v515, 0
    %v520 = vsel %vm183, %v517, 0
    %522 = vmatprep.subr.mxu0 0.0
    %523 = vmatpush1.xpose.msra.mxu0 %v520
    %524 = vmatprep.subr.mxu0 0.0
    %525 = vmatpush1.xpose.msra.mxu0 0.0
    %526 = vmatprep.subr.mxu0 0.0
    %527 = vmatpush1.xpose.msra.mxu0 0.0
    %528 = vmatprep.subr.mxu0 0.0
    %529 = vmatpush1.xpose.msra.mxu0 0.0
    %530 = vmatprep.subr.mxu0 0.0
    %531 = vmatpush1.xpose.msra.mxu0 0.0
    %532 = vmatprep.subr.mxu0 0.0
    %533 = vmatpush1.xpose.msra.mxu0 0.0
    %534 = vmatprep.subr.mxu0 0.0
    %535 = vmatpush1.xpose.msra.mxu0 0.0
    %536 = vmatprep.subr.mxu0 0.0
    %537 = vmatpush1.xpose.msra.mxu0 0.0
    %538 = vmatprep.subr.mxu0 0.0
    %539 = vmatpush1.xpose.msra.mxu0 0.0
    %540 = vmatprep.subr.mxu0 0.0
    %541 = vmatpush1.xpose.msra.mxu0 0.0
    %542 = vmatprep.subr.mxu0 0.0
    %543 = vmatpush1.xpose.msra.mxu0 0.0
    %544 = vmatprep.subr.mxu0 0.0
    %545 = vmatpush1.xpose.msra.mxu0 0.0
    %546 = vmatprep.subr.mxu0 0.0
    %547 = vmatpush1.xpose.msra.mxu0 0.0
    %548 = vmatprep.subr.mxu0 0.0
    %549 = vmatpush1.xpose.msra.mxu0 0.0
    %550 = vmatprep.subr.mxu0 0.0
    %551 = vmatpush1.xpose.msra.mxu0 0.0
    %552 = vmatprep.subr.mxu0 0.0
    %553 = vmatpush1.xpose.msra.mxu0 0.0
    %554 = vmatprep.subr.mxu0 0.0
    %555 = vmatpush1.xpose.msra.mxu0 0.0
    %556 = vmatprep.subr.mxu0 0.0
    %557 = vmatpush1.xpose.msra.mxu0 0.0
    %558 = vmatprep.subr.mxu0 0.0
    %559 = vmatpush1.xpose.msra.mxu0 0.0
    %560 = vmatprep.subr.mxu0 0.0
    %561 = vmatpush1.xpose.msra.mxu0 0.0
    %562 = vmatprep.subr.mxu0 0.0
    %563 = vmatpush1.xpose.msra.mxu0 0.0
    %564 = vmatprep.subr.mxu0 0.0
    %565 = vmatpush1.xpose.msra.mxu0 0.0
    %566 = vmatprep.subr.mxu0 0.0
    %567 = vmatpush1.xpose.msra.mxu0 0.0
    %568 = vmatprep.subr.mxu0 0.0
    %569 = vmatpush1.xpose.msra.mxu0 0.0
    %570 = vmatprep.subr.mxu0 0.0
    %571 = vmatpush1.xpose.msra.mxu0 0.0
    %572 = vmatprep.subr.mxu0 0.0
    %573 = vmatpush1.xpose.msra.mxu0 0.0
    %574 = vmatprep.subr.mxu0 0.0
    %575 = vmatpush1.xpose.msra.mxu0 0.0
    %576 = vmatprep.subr.mxu0 0.0
    %577 = vmatpush1.xpose.msra.mxu0 0.0
    %578 = vmatprep.subr.mxu0 0.0
    %579 = vmatpush1.xpose.msra.mxu0 0.0
    %580 = vmatprep.subr.mxu0 0.0
    %581 = vmatpush1.xpose.msra.mxu0 0.0
    %582 = vmatprep.subr.mxu0 0.0
    %583 = vmatpush1.xpose.msra.mxu0 0.0
    %584 = vmatprep.subr.mxu0 0.0
    %585 = vmatpush1.xpose.msra.mxu0 0.0
    %586 = vmatprep.mubr.f32.mxu0 0.0
    %587 = vmatmul.mubr.f32.gmra.mrb[0].mxu0 %v518
    %v588 = vpop.f32.mrb[0].mxu0
    %v589 = vadd.f32 0.0, %v588
    %v590 = vpop.f32.mrb[0].mxu0
    %591 = vdwg.mxu0
    %592 = vrot.lane.b32.xlu0 %v172, 120
    %v593 = vpop.permute.xlu0 %592
    %594 = vrot.lane.b32.xlu0 %v172, 88
    %v595 = vpop.permute.xlu0 %594
    %v596 = vsel %vm183, %v593, 0
    %v598 = vsel %vm183, %v595, 0
    %600 = vmatprep.subr.mxu0 0.0
    %601 = vmatpush1.xpose.msra.mxu0 %v598
    %602 = vmatprep.subr.mxu0 0.0
    %603 = vmatpush1.xpose.msra.mxu0 0.0
    %604 = vmatprep.subr.mxu0 0.0
    %605 = vmatpush1.xpose.msra.mxu0 0.0
    %606 = vmatprep.subr.mxu0 0.0
    %607 = vmatpush1.xpose.msra.mxu0 0.0
    %608 = vmatprep.subr.mxu0 0.0
    %609 = vmatpush1.xpose.msra.mxu0 0.0
    %610 = vmatprep.subr.mxu0 0.0
    %611 = vmatpush1.xpose.msra.mxu0 0.0
    %612 = vmatprep.subr.mxu0 0.0
    %613 = vmatpush1.xpose.msra.mxu0 0.0
    %614 = vmatprep.subr.mxu0 0.0
    %615 = vmatpush1.xpose.msra.mxu0 0.0
    %616 = vmatprep.subr.mxu0 0.0
    %617 = vmatpush1.xpose.msra.mxu0 0.0
    %618 = vmatprep.subr.mxu0 0.0
    %619 = vmatpush1.xpose.msra.mxu0 0.0
    %620 = vmatprep.subr.mxu0 0.0
    %621 = vmatpush1.xpose.msra.mxu0 0.0
    %622 = vmatprep.subr.mxu0 0.0
    %623 = vmatpush1.xpose.msra.mxu0 0.0
    %624 = vmatprep.subr.mxu0 0.0
    %625 = vmatpush1.xpose.msra.mxu0 0.0
    %626 = vmatprep.subr.mxu0 0.0
    %627 = vmatpush1.xpose.msra.mxu0 0.0
    %628 = vmatprep.subr.mxu0 0.0
    %629 = vmatpush1.xpose.msra.mxu0 0.0
    %630 = vmatprep.subr.mxu0 0.0
    %631 = vmatpush1.xpose.msra.mxu0 0.0
    %632 = vmatprep.subr.mxu0 0.0
    %633 = vmatpush1.xpose.msra.mxu0 0.0
    %634 = vmatprep.subr.mxu0 0.0
    %635 = vmatpush1.xpose.msra.mxu0 0.0
    %636 = vmatprep.subr.mxu0 0.0
    %637 = vmatpush1.xpose.msra.mxu0 0.0
    %638 = vmatprep.subr.mxu0 0.0
    %639 = vmatpush1.xpose.msra.mxu0 0.0
    %640 = vmatprep.subr.mxu0 0.0
    %641 = vmatpush1.xpose.msra.mxu0 0.0
    %642 = vmatprep.subr.mxu0 0.0
    %643 = vmatpush1.xpose.msra.mxu0 0.0
    %644 = vmatprep.subr.mxu0 0.0
    %645 = vmatpush1.xpose.msra.mxu0 0.0
    %646 = vmatprep.subr.mxu0 0.0
    %647 = vmatpush1.xpose.msra.mxu0 0.0
    %648 = vmatprep.subr.mxu0 0.0
    %649 = vmatpush1.xpose.msra.mxu0 0.0
    %650 = vmatprep.subr.mxu0 0.0
    %651 = vmatpush1.xpose.msra.mxu0 0.0
    %652 = vmatprep.subr.mxu0 0.0
    %653 = vmatpush1.xpose.msra.mxu0 0.0
    %654 = vmatprep.subr.mxu0 0.0
    %655 = vmatpush1.xpose.msra.mxu0 0.0
    %656 = vmatprep.subr.mxu0 0.0
    %657 = vmatpush1.xpose.msra.mxu0 0.0
    %658 = vmatprep.subr.mxu0 0.0
    %659 = vmatpush1.xpose.msra.mxu0 0.0
    %660 = vmatprep.subr.mxu0 0.0
    %661 = vmatpush1.xpose.msra.mxu0 0.0
    %662 = vmatprep.subr.mxu0 0.0
    %663 = vmatpush1.xpose.msra.mxu0 0.0
    %664 = vmatprep.mubr.f32.mxu0 0.0
    %665 = vmatmul.mubr.f32.gmra.mrb[0].mxu0 %v596
    %v666 = vpop.f32.mrb[0].mxu0
    %v667 = vadd.f32 0.0, %v666
    %v668 = vpop.f32.mrb[0].mxu0
    %669 = vdwg.mxu0
    %v670 = vsel %vm336, %v589, -1e+30
    %v671 = vsel %vm336, %v667, -1e+30
    %v672 = vsel %vm183, %v670, -inf
    %673 = vmax.xlane.f32.xlu0 %v672
    %v674 = vpop.xlane.xlu0 %673
    %v675 = vsel %vm183, %v671, -inf
    %676 = vmax.xlane.f32.xlu0 %v675
    %v677 = vpop.xlane.xlu0 %676
    %v678 = vsub.f32 %v670, %v674
    %v679 = vsub.f32 %v671, %v677
    %v680 = vmul.f32 %v678, 1.442695
    %v681 = vpow.pop %v680
    %v682 = vmul.f32 %v679, 1.442695
    %v683 = vpow.pop %v682
    %v684 = vsel %vm183, %v681, 0.0
    %685 = vadd.xlane.f32.xlu0 %v684
    %v686 = vpop.xlane.xlu0 %685
    %v687 = vsel %vm183, %v683, 0.0
    %688 = vadd.xlane.f32.xlu0 %v687
    %v689 = vpop.xlane.xlu0 %688
    %v690 = vrcp.pop %v686
    %v691 = vrcp.pop %v689
    %v692 = vmul.f32 %v681, %v690
    %v693 = vmul.f32 %v683, %v691
    %694 = vrot.lane.b32.xlu0 %v167, 56
    %v695 = vpop.permute.xlu0 %694
    %v698 = vsel %vm183, %v692, 0
    %700 = vmatprep.subr.mxu0 0.0
    %701 = vmatpush1.msra.mxu0 %v695
    %702 = vmatprep.subr.mxu0 0.0
    %703 = vmatpush1.msra.mxu0 0.0
    %704 = vmatprep.subr.mxu0 0.0
    %705 = vmatpush1.msra.mxu0 0.0
    %706 = vmatprep.subr.mxu0 0.0
    %707 = vmatpush1.msra.mxu0 0.0
    %708 = vmatprep.subr.mxu0 0.0
    %709 = vmatpush1.msra.mxu0 0.0
    %710 = vmatprep.subr.mxu0 0.0
    %711 = vmatpush1.msra.mxu0 0.0
    %712 = vmatprep.subr.mxu0 0.0
    %713 = vmatpush1.msra.mxu0 0.0
    %714 = vmatprep.subr.mxu0 0.0
    %715 = vmatpush1.msra.mxu0 0.0
    %716 = vmatprep.subr.mxu0 0.0
    %717 = vmatpush1.msra.mxu0 0.0
    %718 = vmatprep.subr.mxu0 0.0
    %719 = vmatpush1.msra.mxu0 0.0
    %720 = vmatprep.subr.mxu0 0.0
    %721 = vmatpush1.msra.mxu0 0.0
    %722 = vmatprep.subr.mxu0 0.0
    %723 = vmatpush1.msra.mxu0 0.0
    %724 = vmatprep.subr.mxu0 0.0
    %725 = vmatpush1.msra.mxu0 0.0
    %726 = vmatprep.subr.mxu0 0.0
    %727 = vmatpush1.msra.mxu0 0.0
    %728 = vmatprep.subr.mxu0 0.0
    %729 = vmatpush1.msra.mxu0 0.0
    %730 = vmatprep.subr.mxu0 0.0
    %731 = vmatpush1.msra.mxu0 0.0
    %732 = vmatprep.subr.mxu0 0.0
    %733 = vmatpush1.msra.mxu0 0.0
    %734 = vmatprep.subr.mxu0 0.0
    %735 = vmatpush1.msra.mxu0 0.0
    %736 = vmatprep.subr.mxu0 0.0
    %737 = vmatpush1.msra.mxu0 0.0
    %738 = vmatprep.subr.mxu0 0.0
    %739 = vmatpush1.msra.mxu0 0.0
    %740 = vmatprep.subr.mxu0 0.0
    %741 = vmatpush1.msra.mxu0 0.0
    %742 = vmatprep.subr.mxu0 0.0
    %743 = vmatpush1.msra.mxu0 0.0
    %744 = vmatprep.subr.mxu0 0.0
    %745 = vmatpush1.msra.mxu0 0.0
    %746 = vmatprep.subr.mxu0 0.0
    %747 = vmatpush1.msra.mxu0 0.0
    %748 = vmatprep.subr.mxu0 0.0
    %749 = vmatpush1.msra.mxu0 0.0
    %750 = vmatprep.subr.mxu0 0.0
    %751 = vmatpush1.msra.mxu0 0.0
    %752 = vmatprep.subr.mxu0 0.0
    %753 = vmatpush1.msra.mxu0 0.0
    %754 = vmatprep.subr.mxu0 0.0
    %755 = vmatpush1.msra.mxu0 0.0
    %756 = vmatprep.subr.mxu0 0.0
    %757 = vmatpush1.msra.mxu0 0.0
    %758 = vmatprep.subr.mxu0 0.0
    %759 = vmatpush1.msra.mxu0 0.0
    %760 = vmatprep.subr.mxu0 0.0
    %761 = vmatpush1.msra.mxu0 0.0
    %762 = vmatprep.subr.mxu0 0.0
    %763 = vmatpush1.msra.mxu0 0.0
    %764 = vmatprep.mubr.f32.mxu0 0.0
    %765 = vmatmul.mubr.f32.gmra.mrb[0].mxu0 %v698
    %v766 = vpop.f32.mrb[0].mxu0
    %v767 = vadd.f32 0.0, %v766
    %v768 = vpop.f32.mrb[0].mxu0
    %769 = vdwg.mxu0
    %770 = vrot.lane.b32.xlu0 %v172, 56
    %v771 = vpop.permute.xlu0 %770
    %v774 = vsel %vm183, %v693, 0
    %776 = vmatprep.subr.mxu0 0.0
    %777 = vmatpush1.msra.mxu0 %v771
    %778 = vmatprep.subr.mxu0 0.0
    %779 = vmatpush1.msra.mxu0 0.0
    %780 = vmatprep.subr.mxu0 0.0
    %781 = vmatpush1.msra.mxu0 0.0
    %782 = vmatprep.subr.mxu0 0.0
    %783 = vmatpush1.msra.mxu0 0.0
    %784 = vmatprep.subr.mxu0 0.0
    %785 = vmatpush1.msra.mxu0 0.0
    %786 = vmatprep.subr.mxu0 0.0
    %787 = vmatpush1.msra.mxu0 0.0
    %788 = vmatprep.subr.mxu0 0.0
    %789 = vmatpush1.msra.mxu0 0.0
    %790 = vmatprep.subr.mxu0 0.0
    %791 = vmatpush1.msra.mxu0 0.0
    %792 = vmatprep.subr.mxu0 0.0
    %793 = vmatpush1.msra.mxu0 0.0
    %794 = vmatprep.subr.mxu0 0.0
    %795 = vmatpush1.msra.mxu0 0.0
    %796 = vmatprep.subr.mxu0 0.0
    %797 = vmatpush1.msra.mxu0 0.0
    %798 = vmatprep.subr.mxu0 0.0
    %799 = vmatpush1.msra.mxu0 0.0
    %800 = vmatprep.subr.mxu0 0.0
    %801 = vmatpush1.msra.mxu0 0.0
    %802 = vmatprep.subr.mxu0 0.0
    %803 = vmatpush1.msra.mxu0 0.0
    %804 = vmatprep.subr.mxu0 0.0
    %805 = vmatpush1.msra.mxu0 0.0
    %806 = vmatprep.subr.mxu0 0.0
    %807 = vmatpush1.msra.mxu0 0.0
    %808 = vmatprep.subr.mxu0 0.0
    %809 = vmatpush1.msra.mxu0 0.0
    %810 = vmatprep.subr.mxu0 0.0
    %811 = vmatpush1.msra.mxu0 0.0
    %812 = vmatprep.subr.mxu0 0.0
    %813 = vmatpush1.msra.mxu0 0.0
    %814 = vmatprep.subr.mxu0 0.0
    %815 = vmatpush1.msra.mxu0 0.0
    %816 = vmatprep.subr.mxu0 0.0
    %817 = vmatpush1.msra.mxu0 0.0
    %818 = vmatprep.subr.mxu0 0.0
    %819 = vmatpush1.msra.mxu0 0.0
    %820 = vmatprep.subr.mxu0 0.0
    %821 = vmatpush1.msra.mxu0 0.0
    %822 = vmatprep.subr.mxu0 0.0
    %823 = vmatpush1.msra.mxu0 0.0
    %824 = vmatprep.subr.mxu0 0.0
    %825 = vmatpush1.msra.mxu0 0.0
    %826 = vmatprep.subr.mxu0 0.0
    %827 = vmatpush1.msra.mxu0 0.0
    %828 = vmatprep.subr.mxu0 0.0
    %829 = vmatpush1.msra.mxu0 0.0
    %830 = vmatprep.subr.mxu0 0.0
    %831 = vmatpush1.msra.mxu0 0.0
    %832 = vmatprep.subr.mxu0 0.0
    %833 = vmatpush1.msra.mxu0 0.0
    %834 = vmatprep.subr.mxu0 0.0
    %835 = vmatpush1.msra.mxu0 0.0
    %836 = vmatprep.subr.mxu0 0.0
    %837 = vmatpush1.msra.mxu0 0.0
    %838 = vmatprep.subr.mxu0 0.0
    %839 = vmatpush1.msra.mxu0 0.0
    %840 = vmatprep.mubr.f32.mxu0 0.0
    %841 = vmatmul.mubr.f32.gmra.mrb[0].mxu0 %v774
    %v842 = vpop.f32.mrb[0].mxu0
    %v843 = vadd.f32 0.0, %v842
    %v844 = vpop.f32.mrb[0].mxu0
    %845 = vdwg.mxu0
    %v846 = vld [vmem:[#allocation5 + $0x10] sm:$0xff]
    %848 = vrot.lane.b32.xlu0 %v846, 32
    %v849 = vpop.permute.xlu0 %848
    %v852 = vsel %vm183, %v767, 0
    %v855 = vsel %vm183, %v843, 0
    %857 = vmatprep.subr.mxu0 0.0
    %858 = vmatpush1.msra.mxu0 %v849
    %859 = vmatprep.subr.mxu0 0.0
    %860 = vmatpush1.msra.mxu0 0.0
    %861 = vmatprep.subr.mxu0 0.0
    %862 = vmatpush1.msra.mxu0 0.0
    %863 = vmatprep.subr.mxu0 0.0
    %864 = vmatpush1.msra.mxu0 0.0
    %865 = vmatprep.subr.mxu0 0.0
    %866 = vmatpush1.msra.mxu0 0.0
    %867 = vmatprep.subr.mxu0 0.0
    %868 = vmatpush1.msra.mxu0 0.0
    %869 = vmatprep.subr.mxu0 0.0
    %870 = vmatpush1.msra.mxu0 0.0
    %871 = vmatprep.subr.mxu0 0.0
    %872 = vmatpush1.msra.mxu0 0.0
    %873 = vmatprep.subr.mxu0 0.0
    %874 = vmatpush1.msra.mxu0 0.0
    %875 = vmatprep.subr.mxu0 0.0
    %876 = vmatpush1.msra.mxu0 0.0
    %877 = vmatprep.subr.mxu0 0.0
    %878 = vmatpush1.msra.mxu0 0.0
    %879 = vmatprep.subr.mxu0 0.0
    %880 = vmatpush1.msra.mxu0 0.0
    %881 = vmatprep.subr.mxu0 0.0
    %882 = vmatpush1.msra.mxu0 0.0
    %883 = vmatprep.subr.mxu0 0.0
    %884 = vmatpush1.msra.mxu0 0.0
    %885 = vmatprep.subr.mxu0 0.0
    %886 = vmatpush1.msra.mxu0 0.0
    %887 = vmatprep.subr.mxu0 0.0
    %888 = vmatpush1.msra.mxu0 0.0
    %889 = vmatprep.subr.mxu0 0.0
    %890 = vmatpush1.msra.mxu0 0.0
    %891 = vmatprep.subr.mxu0 0.0
    %892 = vmatpush1.msra.mxu0 0.0
    %893 = vmatprep.subr.mxu0 0.0
    %894 = vmatpush1.msra.mxu0 0.0
    %895 = vmatprep.subr.mxu0 0.0
    %896 = vmatpush1.msra.mxu0 0.0
    %897 = vmatprep.subr.mxu0 0.0
    %898 = vmatpush1.msra.mxu0 0.0
    %899 = vmatprep.subr.mxu0 0.0
    %900 = vmatpush1.msra.mxu0 0.0
    %901 = vmatprep.subr.mxu0 0.0
    %902 = vmatpush1.msra.mxu0 0.0
    %903 = vmatprep.subr.mxu0 0.0
    %904 = vmatpush1.msra.mxu0 0.0
    %905 = vmatprep.subr.mxu0 0.0
    %906 = vmatpush1.msra.mxu0 0.0
    %907 = vmatprep.subr.mxu0 0.0
    %908 = vmatpush1.msra.mxu0 0.0
    %909 = vmatprep.subr.mxu0 0.0
    %910 = vmatpush1.msra.mxu0 0.0
    %911 = vmatprep.subr.mxu0 0.0
    %912 = vmatpush1.msra.mxu0 0.0
    %913 = vmatprep.subr.mxu0 0.0
    %914 = vmatpush1.msra.mxu0 0.0
    %915 = vmatprep.subr.mxu0 0.0
    %916 = vmatpush1.msra.mxu0 0.0
    %917 = vmatprep.subr.mxu0 0.0
    %918 = vmatpush1.msra.mxu0 0.0
    %919 = vmatprep.subr.mxu0 0.0
    %920 = vmatpush1.msra.mxu0 0.0
    %921 = vmatprep.mubr.f32.mxu0 0.0
    %922 = vmatmul.mubr.f32.gmra.mrb[0].mxu0 %v852
    %v923 = vpop.f32.mrb[0].mxu0
    %v924 = vadd.f32 0.0, %v923
    %v925 = vpop.f32.mrb[0].mxu0
    %926 = vmatprep.mubr.f32.mxu0 0.0
    %927 = vmatmul.mubr.f32.gmra.mrb[0].mxu0 %v855
    %v928 = vpop.f32.mrb[0].mxu0
    %v929 = vadd.f32 0.0, %v928
    %v930 = vpop.f32.mrb[0].mxu0
    %931 = vdwg.mxu0
    %933 = vrot.lane.b32.xlu0 %v513, 32
    %v934 = vpop.permute.xlu0 %933
    %v937 = vsel %vm183, %v434, 0
    %v940 = vsel %vm183, %v510, 0
    %942 = vmatprep.subr.mxu0 0.0
    %943 = vmatpush1.msra.mxu0 %v934
    %944 = vmatprep.subr.mxu0 0.0
    %945 = vmatpush1.msra.mxu0 0.0
    %946 = vmatprep.subr.mxu0 0.0
    %947 = vmatpush1.msra.mxu0 0.0
    %948 = vmatprep.subr.mxu0 0.0
    %949 = vmatpush1.msra.mxu0 0.0
    %950 = vmatprep.subr.mxu0 0.0
    %951 = vmatpush1.msra.mxu0 0.0
    %952 = vmatprep.subr.mxu0 0.0
    %953 = vmatpush1.msra.mxu0 0.0
    %954 = vmatprep.subr.mxu0 0.0
    %955 = vmatpush1.msra.mxu0 0.0
    %956 = vmatprep.subr.mxu0 0.0
    %957 = vmatpush1.msra.mxu0 0.0
    %958 = vmatprep.subr.mxu0 0.0
    %959 = vmatpush1.msra.mxu0 0.0
    %960 = vmatprep.subr.mxu0 0.0
    %961 = vmatpush1.msra.mxu0 0.0
    %962 = vmatprep.subr.mxu0 0.0
    %963 = vmatpush1.msra.mxu0 0.0
    %964 = vmatprep.subr.mxu0 0.0
    %965 = vmatpush1.msra.mxu0 0.0
    %966 = vmatprep.subr.mxu0 0.0
    %967 = vmatpush1.msra.mxu0 0.0
    %968 = vmatprep.subr.mxu0 0.0
    %969 = vmatpush1.msra.mxu0 0.0
    %970 = vmatprep.subr.mxu0 0.0
    %971 = vmatpush1.msra.mxu0 0.0
    %972 = vmatprep.subr.mxu0 0.0
    %973 = vmatpush1.msra.mxu0 0.0
    %974 = vmatprep.subr.mxu0 0.0
    %975 = vmatpush1.msra.mxu0 0.0
    %976 = vmatprep.subr.mxu0 0.0
    %977 = vmatpush1.msra.mxu0 0.0
    %978 = vmatprep.subr.mxu0 0.0
    %979 = vmatpush1.msra.mxu0 0.0
    %980 = vmatprep.subr.mxu0 0.0
    %981 = vmatpush1.msra.mxu0 0.0
    %982 = vmatprep.subr.mxu0 0.0
    %983 = vmatpush1.msra.mxu0 0.0
    %984 = vmatprep.subr.mxu0 0.0
    %985 = vmatpush1.msra.mxu0 0.0
    %986 = vmatprep.subr.mxu0 0.0
    %987 = vmatpush1.msra.mxu0 0.0
    %988 = vmatprep.subr.mxu0 0.0
    %989 = vmatpush1.msra.mxu0 0.0
    %990 = vmatprep.subr.mxu0 0.0
    %991 = vmatpush1.msra.mxu0 0.0
    %992 = vmatprep.subr.mxu0 0.0
    %993 = vmatpush1.msra.mxu0 0.0
    %994 = vmatprep.subr.mxu0 0.0
    %995 = vmatpush1.msra.mxu0 0.0
    %996 = vmatprep.subr.mxu0 0.0
    %997 = vmatpush1.msra.mxu0 0.0
    %998 = vmatprep.subr.mxu0 0.0
    %999 = vmatpush1.msra.mxu0 0.0
    %1000 = vmatprep.subr.mxu0 0.0
    %1001 = vmatpush1.msra.mxu0 0.0
    %1002 = vmatprep.subr.mxu0 0.0
    %1003 = vmatpush1.msra.mxu0 0.0
    %1004 = vmatprep.subr.mxu0 0.0
    %1005 = vmatpush1.msra.mxu0 0.0
    %1006 = vmatprep.mubr.f32.mxu0 0.0
    %1007 = vmatmul.mubr.f32.gmra.mrb[0].mxu0 %v937
    %v1008 = vpop.f32.mrb[0].mxu0
    %v1009 = vadd.f32 %v924, %v1008
    %v1010 = vpop.f32.mrb[0].mxu0
    %1011 = vmatprep.mubr.f32.mxu0 0.0
    %1012 = vmatmul.mubr.f32.gmra.mrb[0].mxu0 %v940
    %v1013 = vpop.f32.mrb[0].mxu0
    %v1014 = vadd.f32 %v929, %v1013
    %v1015 = vpop.f32.mrb[0].mxu0
    %1016 = vdwg.mxu0
    %1017 = vrot.lane.b32.xlu0 %v167, 112
    %v1018 = vpop.permute.xlu0 %1017
    %1019 = vrot.lane.b32.xlu0 %v167, 80
    %v1020 = vpop.permute.xlu0 %1019
    %v1021 = vsel %vm183, %v1018, 0
    %v1023 = vsel %vm183, %v1020, 0
    %1025 = vmatprep.subr.mxu0 0.0
    %1026 = vmatpush1.xpose.msra.mxu0 %v1023
    %1027 = vmatprep.subr.mxu0 0.0
    %1028 = vmatpush1.xpose.msra.mxu0 0.0
    %1029 = vmatprep.subr.mxu0 0.0
    %1030 = vmatpush1.xpose.msra.mxu0 0.0
    %1031 = vmatprep.subr.mxu0 0.0
    %1032 = vmatpush1.xpose.msra.mxu0 0.0
    %1033 = vmatprep.subr.mxu0 0.0
    %1034 = vmatpush1.xpose.msra.mxu0 0.0
    %1035 = vmatprep.subr.mxu0 0.0
    %1036 = vmatpush1.xpose.msra.mxu0 0.0
    %1037 = vmatprep.subr.mxu0 0.0
    %1038 = vmatpush1.xpose.msra.mxu0 0.0
    %1039 = vmatprep.subr.mxu0 0.0
    %1040 = vmatpush1.xpose.msra.mxu0 0.0
    %1041 = vmatprep.subr.mxu0 0.0
    %1042 = vmatpush1.xpose.msra.mxu0 0.0
    %1043 = vmatprep.subr.mxu0 0.0
    %1044 = vmatpush1.xpose.msra.mxu0 0.0
    %1045 = vmatprep.subr.mxu0 0.0
    %1046 = vmatpush1.xpose.msra.mxu0 0.0
    %1047 = vmatprep.subr.mxu0 0.0
    %1048 = vmatpush1.xpose.msra.mxu0 0.0
    %1049 = vmatprep.subr.mxu0 0.0
    %1050 = vmatpush1.xpose.msra.mxu0 0.0
    %1051 = vmatprep.subr.mxu0 0.0
    %1052 = vmatpush1.xpose.msra.mxu0 0.0
    %1053 = vmatprep.subr.mxu0 0.0
    %1054 = vmatpush1.xpose.msra.mxu0 0.0
    %1055 = vmatprep.subr.mxu0 0.0
    %1056 = vmatpush1.xpose.msra.mxu0 0.0
    %1057 = vmatprep.subr.mxu0 0.0
    %1058 = vmatpush1.xpose.msra.mxu0 0.0
    %1059 = vmatprep.subr.mxu0 0.0
    %1060 = vmatpush1.xpose.msra.mxu0 0.0
    %1061 = vmatprep.subr.mxu0 0.0
    %1062 = vmatpush1.xpose.msra.mxu0 0.0
    %1063 = vmatprep.subr.mxu0 0.0
    %1064 = vmatpush1.xpose.msra.mxu0 0.0
    %1065 = vmatprep.subr.mxu0 0.0
    %1066 = vmatpush1.xpose.msra.mxu0 0.0
    %1067 = vmatprep.subr.mxu0 0.0
    %1068 = vmatpush1.xpose.msra.mxu0 0.0
    %1069 = vmatprep.subr.mxu0 0.0
    %1070 = vmatpush1.xpose.msra.mxu0 0.0
    %1071 = vmatprep.subr.mxu0 0.0
    %1072 = vmatpush1.xpose.msra.mxu0 0.0
    %1073 = vmatprep.subr.mxu0 0.0
    %1074 = vmatpush1.xpose.msra.mxu0 0.0
    %1075 = vmatprep.subr.mxu0 0.0
    %1076 = vmatpush1.xpose.msra.mxu0 0.0
    %1077 = vmatprep.subr.mxu0 0.0
    %1078 = vmatpush1.xpose.msra.mxu0 0.0
    %1079 = vmatprep.subr.mxu0 0.0
    %1080 = vmatpush1.xpose.msra.mxu0 0.0
    %1081 = vmatprep.subr.mxu0 0.0
    %1082 = vmatpush1.xpose.msra.mxu0 0.0
    %1083 = vmatprep.subr.mxu0 0.0
    %1084 = vmatpush1.xpose.msra.mxu0 0.0
    %1085 = vmatprep.subr.mxu0 0.0
    %1086 = vmatpush1.xpose.msra.mxu0 0.0
    %1087 = vmatprep.subr.mxu0 0.0
    %1088 = vmatpush1.xpose.msra.mxu0 0.0
    %1089 = vmatprep.mubr.f32.mxu0 0.0
    %1090 = vmatmul.mubr.f32.gmra.mrb[0].mxu0 %v1021
    %v1091 = vpop.f32.mrb[0].mxu0
    %v1092 = vadd.f32 0.0, %v1091
    %v1093 = vpop.f32.mrb[0].mxu0
    %1094 = vdwg.mxu0
    %1095 = vrot.lane.b32.xlu0 %v172, 112
    %v1096 = vpop.permute.xlu0 %1095
    %1097 = vrot.lane.b32.xlu0 %v172, 80
    %v1098 = vpop.permute.xlu0 %1097
    %v1099 = vsel %vm183, %v1096, 0
    %v1101 = vsel %vm183, %v1098, 0
    %1103 = vmatprep.subr.mxu0 0.0
    %1104 = vmatpush1.xpose.msra.mxu0 %v1101
    %1105 = vmatprep.subr.mxu0 0.0
    %1106 = vmatpush1.xpose.msra.mxu0 0.0
    %1107 = vmatprep.subr.mxu0 0.0
    %1108 = vmatpush1.xpose.msra.mxu0 0.0
    %1109 = vmatprep.subr.mxu0 0.0
    %1110 = vmatpush1.xpose.msra.mxu0 0.0
    %1111 = vmatprep.subr.mxu0 0.0
    %1112 = vmatpush1.xpose.msra.mxu0 0.0
    %1113 = vmatprep.subr.mxu0 0.0
    %1114 = vmatpush1.xpose.msra.mxu0 0.0
    %1115 = vmatprep.subr.mxu0 0.0
    %1116 = vmatpush1.xpose.msra.mxu0 0.0
    %1117 = vmatprep.subr.mxu0 0.0
    %1118 = vmatpush1.xpose.msra.mxu0 0.0
    %1119 = vmatprep.subr.mxu0 0.0
    %1120 = vmatpush1.xpose.msra.mxu0 0.0
    %1121 = vmatprep.subr.mxu0 0.0
    %1122 = vmatpush1.xpose.msra.mxu0 0.0
    %1123 = vmatprep.subr.mxu0 0.0
    %1124 = vmatpush1.xpose.msra.mxu0 0.0
    %1125 = vmatprep.subr.mxu0 0.0
    %1126 = vmatpush1.xpose.msra.mxu0 0.0
    %1127 = vmatprep.subr.mxu0 0.0
    %1128 = vmatpush1.xpose.msra.mxu0 0.0
    %1129 = vmatprep.subr.mxu0 0.0
    %1130 = vmatpush1.xpose.msra.mxu0 0.0
    %1131 = vmatprep.subr.mxu0 0.0
    %1132 = vmatpush1.xpose.msra.mxu0 0.0
    %1133 = vmatprep.subr.mxu0 0.0
    %1134 = vmatpush1.xpose.msra.mxu0 0.0
    %1135 = vmatprep.subr.mxu0 0.0
    %1136 = vmatpush1.xpose.msra.mxu0 0.0
    %1137 = vmatprep.subr.mxu0 0.0
    %1138 = vmatpush1.xpose.msra.mxu0 0.0
    %1139 = vmatprep.subr.mxu0 0.0
    %1140 = vmatpush1.xpose.msra.mxu0 0.0
    %1141 = vmatprep.subr.mxu0 0.0
    %1142 = vmatpush1.xpose.msra.mxu0 0.0
    %1143 = vmatprep.subr.mxu0 0.0
    %1144 = vmatpush1.xpose.msra.mxu0 0.0
    %1145 = vmatprep.subr.mxu0 0.0
    %1146 = vmatpush1.xpose.msra.mxu0 0.0
    %1147 = vmatprep.subr.mxu0 0.0
    %1148 = vmatpush1.xpose.msra.mxu0 0.0
    %1149 = vmatprep.subr.mxu0 0.0
    %1150 = vmatpush1.xpose.msra.mxu0 0.0
    %1151 = vmatprep.subr.mxu0 0.0
    %1152 = vmatpush1.xpose.msra.mxu0 0.0
    %1153 = vmatprep.subr.mxu0 0.0
    %1154 = vmatpush1.xpose.msra.mxu0 0.0
    %1155 = vmatprep.subr.mxu0 0.0
    %1156 = vmatpush1.xpose.msra.mxu0 0.0
    %1157 = vmatprep.subr.mxu0 0.0
    %1158 = vmatpush1.xpose.msra.mxu0 0.0
    %1159 = vmatprep.subr.mxu0 0.0
    %1160 = vmatpush1.xpose.msra.mxu0 0.0
    %1161 = vmatprep.subr.mxu0 0.0
    %1162 = vmatpush1.xpose.msra.mxu0 0.0
    %1163 = vmatprep.subr.mxu0 0.0
    %1164 = vmatpush1.xpose.msra.mxu0 0.0
    %1165 = vmatprep.subr.mxu0 0.0
    %1166 = vmatpush1.xpose.msra.mxu0 0.0
    %1167 = vmatprep.mubr.f32.mxu0 0.0
    %1168 = vmatmul.mubr.f32.gmra.mrb[0].mxu0 %v1099
    %v1169 = vpop.f32.mrb[0].mxu0
    %v1170 = vadd.f32 0.0, %v1169
    %v1171 = vpop.f32.mrb[0].mxu0
    %1172 = vdwg.mxu0
    %v1173 = vsel %vm336, %v1092, -1e+30
    %v1174 = vsel %vm336, %v1170, -1e+30
    %v1175 = vsel %vm183, %v1173, -inf
    %1176 = vmax.xlane.f32.xlu0 %v1175
    %v1177 = vpop.xlane.xlu0 %1176
    %v1178 = vsel %vm183, %v1174, -inf
    %1179 = vmax.xlane.f32.xlu0 %v1178
    %v1180 = vpop.xlane.xlu0 %1179
    %v1181 = vsub.f32 %v1173, %v1177
    %v1182 = vsub.f32 %v1174, %v1180
    %v1183 = vmul.f32 %v1181, 1.442695
    %v1184 = vpow.pop %v1183
    %v1185 = vmul.f32 %v1182, 1.442695
    %v1186 = vpow.pop %v1185
    %v1187 = vsel %vm183, %v1184, 0.0
    %1188 = vadd.xlane.f32.xlu0 %v1187
    %v1189 = vpop.xlane.xlu0 %1188
    %v1190 = vsel %vm183, %v1186, 0.0
    %1191 = vadd.xlane.f32.xlu0 %v1190
    %v1192 = vpop.xlane.xlu0 %1191
    %v1193 = vrcp.pop %v1189
    %v1194 = vrcp.pop %v1192
    %v1195 = vmul.f32 %v1184, %v1193
    %v1196 = vmul.f32 %v1186, %v1194
    %1197 = vrot.lane.b32.xlu0 %v167, 48
    %v1198 = vpop.permute.xlu0 %1197
    %v1201 = vsel %vm183, %v1195, 0
    %1203 = vmatprep.subr.mxu0 0.0
    %1204 = vmatpush1.msra.mxu0 %v1198
    %1205 = vmatprep.subr.mxu0 0.0
    %1206 = vmatpush1.msra.mxu0 0.0
    %1207 = vmatprep.subr.mxu0 0.0
    %1208 = vmatpush1.msra.mxu0 0.0
    %1209 = vmatprep.subr.mxu0 0.0
    %1210 = vmatpush1.msra.mxu0 0.0
    %1211 = vmatprep.subr.mxu0 0.0
    %1212 = vmatpush1.msra.mxu0 0.0
    %1213 = vmatprep.subr.mxu0 0.0
    %1214 = vmatpush1.msra.mxu0 0.0
    %1215 = vmatprep.subr.mxu0 0.0
    %1216 = vmatpush1.msra.mxu0 0.0
    %1217 = vmatprep.subr.mxu0 0.0
    %1218 = vmatpush1.msra.mxu0 0.0
    %1219 = vmatprep.subr.mxu0 0.0
    %1220 = vmatpush1.msra.mxu0 0.0
    %1221 = vmatprep.subr.mxu0 0.0
    %1222 = vmatpush1.msra.mxu0 0.0
    %1223 = vmatprep.subr.mxu0 0.0
    %1224 = vmatpush1.msra.mxu0 0.0
    %1225 = vmatprep.subr.mxu0 0.0
    %1226 = vmatpush1.msra.mxu0 0.0
    %1227 = vmatprep.subr.mxu0 0.0
    %1228 = vmatpush1.msra.mxu0 0.0
    %1229 = vmatprep.subr.mxu0 0.0
    %1230 = vmatpush1.msra.mxu0 0.0
    %1231 = vmatprep.subr.mxu0 0.0
    %1232 = vmatpush1.msra.mxu0 0.0
    %1233 = vmatprep.subr.mxu0 0.0
    %1234 = vmatpush1.msra.mxu0 0.0
    %1235 = vmatprep.subr.mxu0 0.0
    %1236 = vmatpush1.msra.mxu0 0.0
    %1237 = vmatprep.subr.mxu0 0.0
    %1238 = vmatpush1.msra.mxu0 0.0
    %1239 = vmatprep.subr.mxu0 0.0
    %1240 = vmatpush1.msra.mxu0 0.0
    %1241 = vmatprep.subr.mxu0 0.0
    %1242 = vmatpush1.msra.mxu0 0.0
    %1243 = vmatprep.subr.mxu0 0.0
    %1244 = vmatpush1.msra.mxu0 0.0
    %1245 = vmatprep.subr.mxu0 0.0
    %1246 = vmatpush1.msra.mxu0 0.0
    %1247 = vmatprep.subr.mxu0 0.0
    %1248 = vmatpush1.msra.mxu0 0.0
    %1249 = vmatprep.subr.mxu0 0.0
    %1250 = vmatpush1.msra.mxu0 0.0
    %1251 = vmatprep.subr.mxu0 0.0
    %1252 = vmatpush1.msra.mxu0 0.0
    %1253 = vmatprep.subr.mxu0 0.0
    %1254 = vmatpush1.msra.mxu0 0.0
    %1255 = vmatprep.subr.mxu0 0.0
    %1256 = vmatpush1.msra.mxu0 0.0
    %1257 = vmatprep.subr.mxu0 0.0
    %1258 = vmatpush1.msra.mxu0 0.0
    %1259 = vmatprep.subr.mxu0 0.0
    %1260 = vmatpush1.msra.mxu0 0.0
    %1261 = vmatprep.subr.mxu0 0.0
    %1262 = vmatpush1.msra.mxu0 0.0
    %1263 = vmatprep.subr.mxu0 0.0
    %1264 = vmatpush1.msra.mxu0 0.0
    %1265 = vmatprep.subr.mxu0 0.0
    %1266 = vmatpush1.msra.mxu0 0.0
    %1267 = vmatprep.mubr.f32.mxu0 0.0
    %1268 = vmatmul.mubr.f32.gmra.mrb[0].mxu0 %v1201
    %v1269 = vpop.f32.mrb[0].mxu0
    %v1270 = vadd.f32 0.0, %v1269
    %v1271 = vpop.f32.mrb[0].mxu0
    %1272 = vdwg.mxu0
    %1273 = vrot.lane.b32.xlu0 %v172, 48
    %v1274 = vpop.permute.xlu0 %1273
    %v1277 = vsel %vm183, %v1196, 0
    %1279 = vmatprep.subr.mxu0 0.0
    %1280 = vmatpush1.msra.mxu0 %v1274
    %1281 = vmatprep.subr.mxu0 0.0
    %1282 = vmatpush1.msra.mxu0 0.0
    %1283 = vmatprep.subr.mxu0 0.0
    %1284 = vmatpush1.msra.mxu0 0.0
    %1285 = vmatprep.subr.mxu0 0.0
    %1286 = vmatpush1.msra.mxu0 0.0
    %1287 = vmatprep.subr.mxu0 0.0
    %1288 = vmatpush1.msra.mxu0 0.0
    %1289 = vmatprep.subr.mxu0 0.0
    %1290 = vmatpush1.msra.mxu0 0.0
    %1291 = vmatprep.subr.mxu0 0.0
    %1292 = vmatpush1.msra.mxu0 0.0
    %1293 = vmatprep.subr.mxu0 0.0
    %1294 = vmatpush1.msra.mxu0 0.0
    %1295 = vmatprep.subr.mxu0 0.0
    %1296 = vmatpush1.msra.mxu0 0.0
    %1297 = vmatprep.subr.mxu0 0.0
    %1298 = vmatpush1.msra.mxu0 0.0
    %1299 = vmatprep.subr.mxu0 0.0
    %1300 = vmatpush1.msra.mxu0 0.0
    %1301 = vmatprep.subr.mxu0 0.0
    %1302 = vmatpush1.msra.mxu0 0.0
    %1303 = vmatprep.subr.mxu0 0.0
    %1304 = vmatpush1.msra.mxu0 0.0
    %1305 = vmatprep.subr.mxu0 0.0
    %1306 = vmatpush1.msra.mxu0 0.0
    %1307 = vmatprep.subr.mxu0 0.0
    %1308 = vmatpush1.msra.mxu0 0.0
    %1309 = vmatprep.subr.mxu0 0.0
    %1310 = vmatpush1.msra.mxu0 0.0
    %1311 = vmatprep.subr.mxu0 0.0
    %1312 = vmatpush1.msra.mxu0 0.0
    %1313 = vmatprep.subr.mxu0 0.0
    %1314 = vmatpush1.msra.mxu0 0.0
    %1315 = vmatprep.subr.mxu0 0.0
    %1316 = vmatpush1.msra.mxu0 0.0
    %1317 = vmatprep.subr.mxu0 0.0
    %1318 = vmatpush1.msra.mxu0 0.0
    %1319 = vmatprep.subr.mxu0 0.0
    %1320 = vmatpush1.msra.mxu0 0.0
    %1321 = vmatprep.subr.mxu0 0.0
    %1322 = vmatpush1.msra.mxu0 0.0
    %1323 = vmatprep.subr.mxu0 0.0
    %1324 = vmatpush1.msra.mxu0 0.0
    %1325 = vmatprep.subr.mxu0 0.0
    %1326 = vmatpush1.msra.mxu0 0.0
    %1327 = vmatprep.subr.mxu0 0.0
    %1328 = vmatpush1.msra.mxu0 0.0
    %1329 = vmatprep.subr.mxu0 0.0
    %1330 = vmatpush1.msra.mxu0 0.0
    %1331 = vmatprep.subr.mxu0 0.0
    %1332 = vmatpush1.msra.mxu0 0.0
    %1333 = vmatprep.subr.mxu0 0.0
    %1334 = vmatpush1.msra.mxu0 0.0
    %1335 = vmatprep.subr.mxu0 0.0
    %1336 = vmatpush1.msra.mxu0 0.0
    %1337 = vmatprep.subr.mxu0 0.0
    %1338 = vmatpush1.msra.mxu0 0.0
    %1339 = vmatprep.subr.mxu0 0.0
    %1340 = vmatpush1.msra.mxu0 0.0
    %1341 = vmatprep.subr.mxu0 0.0
    %1342 = vmatpush1.msra.mxu0 0.0
    %1343 = vmatprep.mubr.f32.mxu0 0.0
    %1344 = vmatmul.mubr.f32.gmra.mrb[0].mxu0 %v1277
    %v1345 = vpop.f32.mrb[0].mxu0
    %v1346 = vadd.f32 0.0, %v1345
    %v1347 = vpop.f32.mrb[0].mxu0
    %1348 = vdwg.mxu0
    %v1349 = vld [vmem:[#allocation5 + $0x18] sm:$0xff]
    %1351 = vrot.lane.b32.xlu0 %v1349, 32
    %v1352 = vpop.permute.xlu0 %1351
    %v1355 = vsel %vm183, %v1270, 0
    %v1358 = vsel %vm183, %v1346, 0
    %1360 = vmatprep.subr.mxu0 0.0
    %1361 = vmatpush1.msra.mxu0 %v1352
    %1362 = vmatprep.subr.mxu0 0.0
    %1363 = vmatpush1.msra.mxu0 0.0
    %1364 = vmatprep.subr.mxu0 0.0
    %1365 = vmatpush1.msra.mxu0 0.0
    %1366 = vmatprep.subr.mxu0 0.0
    %1367 = vmatpush1.msra.mxu0 0.0
    %1368 = vmatprep.subr.mxu0 0.0
    %1369 = vmatpush1.msra.mxu0 0.0
    %1370 = vmatprep.subr.mxu0 0.0
    %1371 = vmatpush1.msra.mxu0 0.0
    %1372 = vmatprep.subr.mxu0 0.0
    %1373 = vmatpush1.msra.mxu0 0.0
    %1374 = vmatprep.subr.mxu0 0.0
    %1375 = vmatpush1.msra.mxu0 0.0
    %1376 = vmatprep.subr.mxu0 0.0
    %1377 = vmatpush1.msra.mxu0 0.0
    %1378 = vmatprep.subr.mxu0 0.0
    %1379 = vmatpush1.msra.mxu0 0.0
    %1380 = vmatprep.subr.mxu0 0.0
    %1381 = vmatpush1.msra.mxu0 0.0
    %1382 = vmatprep.subr.mxu0 0.0
    %1383 = vmatpush1.msra.mxu0 0.0
    %1384 = vmatprep.subr.mxu0 0.0
    %1385 = vmatpush1.msra.mxu0 0.0
    %1386 = vmatprep.subr.mxu0 0.0
    %1387 = vmatpush1.msra.mxu0 0.0
    %1388 = vmatprep.subr.mxu0 0.0
    %1389 = vmatpush1.msra.mxu0 0.0
    %1390 = vmatprep.subr.mxu0 0.0
    %1391 = vmatpush1.msra.mxu0 0.0
    %1392 = vmatprep.subr.mxu0 0.0
    %1393 = vmatpush1.msra.mxu0 0.0
    %1394 = vmatprep.subr.mxu0 0.0
    %1395 = vmatpush1.msra.mxu0 0.0
    %1396 = vmatprep.subr.mxu0 0.0
    %1397 = vmatpush1.msra.mxu0 0.0
    %1398 = vmatprep.subr.mxu0 0.0
    %1399 = vmatpush1.msra.mxu0 0.0
    %1400 = vmatprep.subr.mxu0 0.0
    %1401 = vmatpush1.msra.mxu0 0.0
    %1402 = vmatprep.subr.mxu0 0.0
    %1403 = vmatpush1.msra.mxu0 0.0
    %1404 = vmatprep.subr.mxu0 0.0
    %1405 = vmatpush1.msra.mxu0 0.0
    %1406 = vmatprep.subr.mxu0 0.0
    %1407 = vmatpush1.msra.mxu0 0.0
    %1408 = vmatprep.subr.mxu0 0.0
    %1409 = vmatpush1.msra.mxu0 0.0
    %1410 = vmatprep.subr.mxu0 0.0
    %1411 = vmatpush1.msra.mxu0 0.0
    %1412 = vmatprep.subr.mxu0 0.0
    %1413 = vmatpush1.msra.mxu0 0.0
    %1414 = vmatprep.subr.mxu0 0.0
    %1415 = vmatpush1.msra.mxu0 0.0
    %1416 = vmatprep.subr.mxu0 0.0
    %1417 = vmatpush1.msra.mxu0 0.0
    %1418 = vmatprep.subr.mxu0 0.0
    %1419 = vmatpush1.msra.mxu0 0.0
    %1420 = vmatprep.subr.mxu0 0.0
    %1421 = vmatpush1.msra.mxu0 0.0
    %1422 = vmatprep.subr.mxu0 0.0
    %1423 = vmatpush1.msra.mxu0 0.0
    %1424 = vmatprep.mubr.f32.mxu0 0.0
    %1425 = vmatmul.mubr.f32.gmra.mrb[0].mxu0 %v1355
    %v1426 = vpop.f32.mrb[0].mxu0
    %v1427 = vadd.f32 0.0, %v1426
    %v1428 = vpop.f32.mrb[0].mxu0
    %1429 = vmatprep.mubr.f32.mxu0 0.0
    %1430 = vmatmul.mubr.f32.gmra.mrb[0].mxu0 %v1358
    %v1431 = vpop.f32.mrb[0].mxu0
    %v1432 = vadd.f32 0.0, %v1431
    %v1433 = vpop.f32.mrb[0].mxu0
    %1434 = vdwg.mxu0
    %v1435 = vadd.f32 %v1009, %v1427
    %v1436 = vadd.f32 %v1014, %v1432
    %1437 = vrot.lane.b32.xlu0 %v167, 104
    %v1438 = vpop.permute.xlu0 %1437
    %1439 = vrot.lane.b32.xlu0 %v167, 72
    %v1440 = vpop.permute.xlu0 %1439
    %v1441 = vsel %vm183, %v1438, 0
    %v1443 = vsel %vm183, %v1440, 0
    %1445 = vmatprep.subr.mxu0 0.0
    %1446 = vmatpush1.xpose.msra.mxu0 %v1443
    %1447 = vmatprep.subr.mxu0 0.0
    %1448 = vmatpush1.xpose.msra.mxu0 0.0
    %1449 = vmatprep.subr.mxu0 0.0
    %1450 = vmatpush1.xpose.msra.mxu0 0.0
    %1451 = vmatprep.subr.mxu0 0.0
    %1452 = vmatpush1.xpose.msra.mxu0 0.0
    %1453 = vmatprep.subr.mxu0 0.0
    %1454 = vmatpush1.xpose.msra.mxu0 0.0
    %1455 = vmatprep.subr.mxu0 0.0
    %1456 = vmatpush1.xpose.msra.mxu0 0.0
    %1457 = vmatprep.subr.mxu0 0.0
    %1458 = vmatpush1.xpose.msra.mxu0 0.0
    %1459 = vmatprep.subr.mxu0 0.0
    %1460 = vmatpush1.xpose.msra.mxu0 0.0
    %1461 = vmatprep.subr.mxu0 0.0
    %1462 = vmatpush1.xpose.msra.mxu0 0.0
    %1463 = vmatprep.subr.mxu0 0.0
    %1464 = vmatpush1.xpose.msra.mxu0 0.0
    %1465 = vmatprep.subr.mxu0 0.0
    %1466 = vmatpush1.xpose.msra.mxu0 0.0
    %1467 = vmatprep.subr.mxu0 0.0
    %1468 = vmatpush1.xpose.msra.mxu0 0.0
    %1469 = vmatprep.subr.mxu0 0.0
    %1470 = vmatpush1.xpose.msra.mxu0 0.0
    %1471 = vmatprep.subr.mxu0 0.0
    %1472 = vmatpush1.xpose.msra.mxu0 0.0
    %1473 = vmatprep.subr.mxu0 0.0
    %1474 = vmatpush1.xpose.msra.mxu0 0.0
    %1475 = vmatprep.subr.mxu0 0.0
    %1476 = vmatpush1.xpose.msra.mxu0 0.0
    %1477 = vmatprep.subr.mxu0 0.0
    %1478 = vmatpush1.xpose.msra.mxu0 0.0
    %1479 = vmatprep.subr.mxu0 0.0
    %1480 = vmatpush1.xpose.msra.mxu0 0.0
    %1481 = vmatprep.subr.mxu0 0.0
    %1482 = vmatpush1.xpose.msra.mxu0 0.0
    %1483 = vmatprep.subr.mxu0 0.0
    %1484 = vmatpush1.xpose.msra.mxu0 0.0
    %1485 = vmatprep.subr.mxu0 0.0
    %1486 = vmatpush1.xpose.msra.mxu0 0.0
    %1487 = vmatprep.subr.mxu0 0.0
    %1488 = vmatpush1.xpose.msra.mxu0 0.0
    %1489 = vmatprep.subr.mxu0 0.0
    %1490 = vmatpush1.xpose.msra.mxu0 0.0
    %1491 = vmatprep.subr.mxu0 0.0
    %1492 = vmatpush1.xpose.msra.mxu0 0.0
    %1493 = vmatprep.subr.mxu0 0.0
    %1494 = vmatpush1.xpose.msra.mxu0 0.0
    %1495 = vmatprep.subr.mxu0 0.0
    %1496 = vmatpush1.xpose.msra.mxu0 0.0
    %1497 = vmatprep.subr.mxu0 0.0
    %1498 = vmatpush1.xpose.msra.mxu0 0.0
    %1499 = vmatprep.subr.mxu0 0.0
    %1500 = vmatpush1.xpose.msra.mxu0 0.0
    %1501 = vmatprep.subr.mxu0 0.0
    %1502 = vmatpush1.xpose.msra.mxu0 0.0
    %1503 = vmatprep.subr.mxu0 0.0
    %1504 = vmatpush1.xpose.msra.mxu0 0.0
    %1505 = vmatprep.subr.mxu0 0.0
    %1506 = vmatpush1.xpose.msra.mxu0 0.0
    %1507 = vmatprep.subr.mxu0 0.0
    %1508 = vmatpush1.xpose.msra.mxu0 0.0
    %1509 = vmatprep.mubr.f32.mxu0 0.0
    %1510 = vmatmul.mubr.f32.gmra.mrb[0].mxu0 %v1441
    %v1511 = vpop.f32.mrb[0].mxu0
    %v1512 = vadd.f32 0.0, %v1511
    %v1513 = vpop.f32.mrb[0].mxu0
    %1514 = vdwg.mxu0
    %1515 = vrot.lane.b32.xlu0 %v172, 104
    %v1516 = vpop.permute.xlu0 %1515
    %1517 = vrot.lane.b32.xlu0 %v172, 72
    %v1518 = vpop.permute.xlu0 %1517
    %v1519 = vsel %vm183, %v1516, 0
    %v1521 = vsel %vm183, %v1518, 0
    %1523 = vmatprep.subr.mxu0 0.0
    %1524 = vmatpush1.xpose.msra.mxu0 %v1521
    %1525 = vmatprep.subr.mxu0 0.0
    %1526 = vmatpush1.xpose.msra.mxu0 0.0
    %1527 = vmatprep.subr.mxu0 0.0
    %1528 = vmatpush1.xpose.msra.mxu0 0.0
    %1529 = vmatprep.subr.mxu0 0.0
    %1530 = vmatpush1.xpose.msra.mxu0 0.0
    %1531 = vmatprep.subr.mxu0 0.0
    %1532 = vmatpush1.xpose.msra.mxu0 0.0
    %1533 = vmatprep.subr.mxu0 0.0
    %1534 = vmatpush1.xpose.msra.mxu0 0.0
    %1535 = vmatprep.subr.mxu0 0.0
    %1536 = vmatpush1.xpose.msra.mxu0 0.0
    %1537 = vmatprep.subr.mxu0 0.0
    %1538 = vmatpush1.xpose.msra.mxu0 0.0
    %1539 = vmatprep.subr.mxu0 0.0
    %1540 = vmatpush1.xpose.msra.mxu0 0.0
    %1541 = vmatprep.subr.mxu0 0.0
    %1542 = vmatpush1.xpose.msra.mxu0 0.0
    %1543 = vmatprep.subr.mxu0 0.0
    %1544 = vmatpush1.xpose.msra.mxu0 0.0
    %1545 = vmatprep.subr.mxu0 0.0
    %1546 = vmatpush1.xpose.msra.mxu0 0.0
    %1547 = vmatprep.subr.mxu0 0.0
    %1548 = vmatpush1.xpose.msra.mxu0 0.0
    %1549 = vmatprep.subr.mxu0 0.0
    %1550 = vmatpush1.xpose.msra.mxu0 0.0
    %1551 = vmatprep.subr.mxu0 0.0
    %1552 = vmatpush1.xpose.msra.mxu0 0.0
    %1553 = vmatprep.subr.mxu0 0.0
    %1554 = vmatpush1.xpose.msra.mxu0 0.0
    %1555 = vmatprep.subr.mxu0 0.0
    %1556 = vmatpush1.xpose.msra.mxu0 0.0
    %1557 = vmatprep.subr.mxu0 0.0
    %1558 = vmatpush1.xpose.msra.mxu0 0.0
    %1559 = vmatprep.subr.mxu0 0.0
    %1560 = vmatpush1.xpose.msra.mxu0 0.0
    %1561 = vmatprep.subr.mxu0 0.0
    %1562 = vmatpush1.xpose.msra.mxu0 0.0
    %1563 = vmatprep.subr.mxu0 0.0
    %1564 = vmatpush1.xpose.msra.mxu0 0.0
    %1565 = vmatprep.subr.mxu0 0.0
    %1566 = vmatpush1.xpose.msra.mxu0 0.0
    %1567 = vmatprep.subr.mxu0 0.0
    %1568 = vmatpush1.xpose.msra.mxu0 0.0
    %1569 = vmatprep.subr.mxu0 0.0
    %1570 = vmatpush1.xpose.msra.mxu0 0.0
    %1571 = vmatprep.subr.mxu0 0.0
    %1572 = vmatpush1.xpose.msra.mxu0 0.0
    %1573 = vmatprep.subr.mxu0 0.0
    %1574 = vmatpush1.xpose.msra.mxu0 0.0
    %1575 = vmatprep.subr.mxu0 0.0
    %1576 = vmatpush1.xpose.msra.mxu0 0.0
    %1577 = vmatprep.subr.mxu0 0.0
    %1578 = vmatpush1.xpose.msra.mxu0 0.0
    %1579 = vmatprep.subr.mxu0 0.0
    %1580 = vmatpush1.xpose.msra.mxu0 0.0
    %1581 = vmatprep.subr.mxu0 0.0
    %1582 = vmatpush1.xpose.msra.mxu0 0.0
    %1583 = vmatprep.subr.mxu0 0.0
    %1584 = vmatpush1.xpose.msra.mxu0 0.0
    %1585 = vmatprep.subr.mxu0 0.0
    %1586 = vmatpush1.xpose.msra.mxu0 0.0
    %1587 = vmatprep.mubr.f32.mxu0 0.0
    %1588 = vmatmul.mubr.f32.gmra.mrb[0].mxu0 %v1519
    %v1589 = vpop.f32.mrb[0].mxu0
    %v1590 = vadd.f32 0.0, %v1589
    %v1591 = vpop.f32.mrb[0].mxu0
    %1592 = vdwg.mxu0
    %v1593 = vsel %vm336, %v1512, -1e+30
    %v1594 = vsel %vm336, %v1590, -1e+30
    %v1595 = vsel %vm183, %v1593, -inf
    %1596 = vmax.xlane.f32.xlu0 %v1595
    %v1597 = vpop.xlane.xlu0 %1596
    %v1598 = vsel %vm183, %v1594, -inf
    %1599 = vmax.xlane.f32.xlu0 %v1598
    %v1600 = vpop.xlane.xlu0 %1599
    %v1601 = vsub.f32 %v1593, %v1597
    %v1602 = vsub.f32 %v1594, %v1600
    %v1603 = vmul.f32 %v1601, 1.442695
    %v1604 = vpow.pop %v1603
    %v1605 = vmul.f32 %v1602, 1.442695
    %v1606 = vpow.pop %v1605
    %v1607 = vsel %vm183, %v1604, 0.0
    %1608 = vadd.xlane.f32.xlu0 %v1607
    %v1609 = vpop.xlane.xlu0 %1608
    %v1610 = vsel %vm183, %v1606, 0.0
    %1611 = vadd.xlane.f32.xlu0 %v1610
    %v1612 = vpop.xlane.xlu0 %1611
    %v1613 = vrcp.pop %v1609
    %v1614 = vrcp.pop %v1612
    %v1615 = vmul.f32 %v1604, %v1613
    %v1616 = vmul.f32 %v1606, %v1614
    %1617 = vrot.lane.b32.xlu0 %v167, 40
    %v1618 = vpop.permute.xlu0 %1617
    %v1621 = vsel %vm183, %v1615, 0
    %1623 = vmatprep.subr.mxu0 0.0
    %1624 = vmatpush1.msra.mxu0 %v1618
    %1625 = vmatprep.subr.mxu0 0.0
    %1626 = vmatpush1.msra.mxu0 0.0
    %1627 = vmatprep.subr.mxu0 0.0
    %1628 = vmatpush1.msra.mxu0 0.0
    %1629 = vmatprep.subr.mxu0 0.0
    %1630 = vmatpush1.msra.mxu0 0.0
    %1631 = vmatprep.subr.mxu0 0.0
    %1632 = vmatpush1.msra.mxu0 0.0
    %1633 = vmatprep.subr.mxu0 0.0
    %1634 = vmatpush1.msra.mxu0 0.0
    %1635 = vmatprep.subr.mxu0 0.0
    %1636 = vmatpush1.msra.mxu0 0.0
    %1637 = vmatprep.subr.mxu0 0.0
    %1638 = vmatpush1.msra.mxu0 0.0
    %1639 = vmatprep.subr.mxu0 0.0
    %1640 = vmatpush1.msra.mxu0 0.0
    %1641 = vmatprep.subr.mxu0 0.0
    %1642 = vmatpush1.msra.mxu0 0.0
    %1643 = vmatprep.subr.mxu0 0.0
    %1644 = vmatpush1.msra.mxu0 0.0
    %1645 = vmatprep.subr.mxu0 0.0
    %1646 = vmatpush1.msra.mxu0 0.0
    %1647 = vmatprep.subr.mxu0 0.0
    %1648 = vmatpush1.msra.mxu0 0.0
    %1649 = vmatprep.subr.mxu0 0.0
    %1650 = vmatpush1.msra.mxu0 0.0
    %1651 = vmatprep.subr.mxu0 0.0
    %1652 = vmatpush1.msra.mxu0 0.0
    %1653 = vmatprep.subr.mxu0 0.0
    %1654 = vmatpush1.msra.mxu0 0.0
    %1655 = vmatprep.subr.mxu0 0.0
    %1656 = vmatpush1.msra.mxu0 0.0
    %1657 = vmatprep.subr.mxu0 0.0
    %1658 = vmatpush1.msra.mxu0 0.0
    %1659 = vmatprep.subr.mxu0 0.0
    %1660 = vmatpush1.msra.mxu0 0.0
    %1661 = vmatprep.subr.mxu0 0.0
    %1662 = vmatpush1.msra.mxu0 0.0
    %1663 = vmatprep.subr.mxu0 0.0
    %1664 = vmatpush1.msra.mxu0 0.0
    %1665 = vmatprep.subr.mxu0 0.0
    %1666 = vmatpush1.msra.mxu0 0.0
    %1667 = vmatprep.subr.mxu0 0.0
    %1668 = vmatpush1.msra.mxu0 0.0
    %1669 = vmatprep.subr.mxu0 0.0
    %1670 = vmatpush1.msra.mxu0 0.0
    %1671 = vmatprep.subr.mxu0 0.0
    %1672 = vmatpush1.msra.mxu0 0.0
    %1673 = vmatprep.subr.mxu0 0.0
    %1674 = vmatpush1.msra.mxu0 0.0
    %1675 = vmatprep.subr.mxu0 0.0
    %1676 = vmatpush1.msra.mxu0 0.0
    %1677 = vmatprep.subr.mxu0 0.0
    %1678 = vmatpush1.msra.mxu0 0.0
    %1679 = vmatprep.subr.mxu0 0.0
    %1680 = vmatpush1.msra.mxu0 0.0
    %1681 = vmatprep.subr.mxu0 0.0
    %1682 = vmatpush1.msra.mxu0 0.0
    %1683 = vmatprep.subr.mxu0 0.0
    %1684 = vmatpush1.msra.mxu0 0.0
    %1685 = vmatprep.subr.mxu0 0.0
    %1686 = vmatpush1.msra.mxu0 0.0
    %1687 = vmatprep.mubr.f32.mxu0 0.0
    %1688 = vmatmul.mubr.f32.gmra.mrb[0].mxu0 %v1621
    %v1689 = vpop.f32.mrb[0].mxu0
    %v1690 = vadd.f32 0.0, %v1689
    %v1691 = vpop.f32.mrb[0].mxu0
    %1692 = vdwg.mxu0
    %1693 = vrot.lane.b32.xlu0 %v172, 40
    %v1694 = vpop.permute.xlu0 %1693
    %v1697 = vsel %vm183, %v1616, 0
    %1699 = vmatprep.subr.mxu0 0.0
    %1700 = vmatpush1.msra.mxu0 %v1694
    %1701 = vmatprep.subr.mxu0 0.0
    %1702 = vmatpush1.msra.mxu0 0.0
    %1703 = vmatprep.subr.mxu0 0.0
    %1704 = vmatpush1.msra.mxu0 0.0
    %1705 = vmatprep.subr.mxu0 0.0
    %1706 = vmatpush1.msra.mxu0 0.0
    %1707 = vmatprep.subr.mxu0 0.0
    %1708 = vmatpush1.msra.mxu0 0.0
    %1709 = vmatprep.subr.mxu0 0.0
    %1710 = vmatpush1.msra.mxu0 0.0
    %1711 = vmatprep.subr.mxu0 0.0
    %1712 = vmatpush1.msra.mxu0 0.0
    %1713 = vmatprep.subr.mxu0 0.0
    %1714 = vmatpush1.msra.mxu0 0.0
    %1715 = vmatprep.subr.mxu0 0.0
    %1716 = vmatpush1.msra.mxu0 0.0
    %1717 = vmatprep.subr.mxu0 0.0
    %1718 = vmatpush1.msra.mxu0 0.0
    %1719 = vmatprep.subr.mxu0 0.0
    %1720 = vmatpush1.msra.mxu0 0.0
    %1721 = vmatprep.subr.mxu0 0.0
    %1722 = vmatpush1.msra.mxu0 0.0
    %1723 = vmatprep.subr.mxu0 0.0
    %1724 = vmatpush1.msra.mxu0 0.0
    %1725 = vmatprep.subr.mxu0 0.0
    %1726 = vmatpush1.msra.mxu0 0.0
    %1727 = vmatprep.subr.mxu0 0.0
    %1728 = vmatpush1.msra.mxu0 0.0
    %1729 = vmatprep.subr.mxu0 0.0
    %1730 = vmatpush1.msra.mxu0 0.0
    %1731 = vmatprep.subr.mxu0 0.0
    %1732 = vmatpush1.msra.mxu0 0.0
    %1733 = vmatprep.subr.mxu0 0.0
    %1734 = vmatpush1.msra.mxu0 0.0
    %1735 = vmatprep.subr.mxu0 0.0
    %1736 = vmatpush1.msra.mxu0 0.0
    %1737 = vmatprep.subr.mxu0 0.0
    %1738 = vmatpush1.msra.mxu0 0.0
    %1739 = vmatprep.subr.mxu0 0.0
    %1740 = vmatpush1.msra.mxu0 0.0
    %1741 = vmatprep.subr.mxu0 0.0
    %1742 = vmatpush1.msra.mxu0 0.0
    %1743 = vmatprep.subr.mxu0 0.0
    %1744 = vmatpush1.msra.mxu0 0.0
    %1745 = vmatprep.subr.mxu0 0.0
    %1746 = vmatpush1.msra.mxu0 0.0
    %1747 = vmatprep.subr.mxu0 0.0
    %1748 = vmatpush1.msra.mxu0 0.0
    %1749 = vmatprep.subr.mxu0 0.0
    %1750 = vmatpush1.msra.mxu0 0.0
    %1751 = vmatprep.subr.mxu0 0.0
    %1752 = vmatpush1.msra.mxu0 0.0
    %1753 = vmatprep.subr.mxu0 0.0
    %1754 = vmatpush1.msra.mxu0 0.0
    %1755 = vmatprep.subr.mxu0 0.0
    %1756 = vmatpush1.msra.mxu0 0.0
    %1757 = vmatprep.subr.mxu0 0.0
    %1758 = vmatpush1.msra.mxu0 0.0
    %1759 = vmatprep.subr.mxu0 0.0
    %1760 = vmatpush1.msra.mxu0 0.0
    %1761 = vmatprep.subr.mxu0 0.0
    %1762 = vmatpush1.msra.mxu0 0.0
    %1763 = vmatprep.mubr.f32.mxu0 0.0
    %1764 = vmatmul.mubr.f32.gmra.mrb[0].mxu0 %v1697
    %v1765 = vpop.f32.mrb[0].mxu0
    %v1766 = vadd.f32 0.0, %v1765
    %v1767 = vpop.f32.mrb[0].mxu0
    %1768 = vdwg.mxu0
    %v1769 = vld [vmem:[#allocation5 + $0x20] sm:$0xff]
    %1771 = vrot.lane.b32.xlu0 %v1769, 32
    %v1772 = vpop.permute.xlu0 %1771
    %v1775 = vsel %vm183, %v1690, 0
    %v1778 = vsel %vm183, %v1766, 0
    %1780 = vmatprep.subr.mxu0 0.0
    %1781 = vmatpush1.msra.mxu0 %v1772
    %1782 = vmatprep.subr.mxu0 0.0
    %1783 = vmatpush1.msra.mxu0 0.0
    %1784 = vmatprep.subr.mxu0 0.0
    %1785 = vmatpush1.msra.mxu0 0.0
    %1786 = vmatprep.subr.mxu0 0.0
    %1787 = vmatpush1.msra.mxu0 0.0
    %1788 = vmatprep.subr.mxu0 0.0
    %1789 = vmatpush1.msra.mxu0 0.0
    %1790 = vmatprep.subr.mxu0 0.0
    %1791 = vmatpush1.msra.mxu0 0.0
    %1792 = vmatprep.subr.mxu0 0.0
    %1793 = vmatpush1.msra.mxu0 0.0
    %1794 = vmatprep.subr.mxu0 0.0
    %1795 = vmatpush1.msra.mxu0 0.0
    %1796 = vmatprep.subr.mxu0 0.0
    %1797 = vmatpush1.msra.mxu0 0.0
    %1798 = vmatprep.subr.mxu0 0.0
    %1799 = vmatpush1.msra.mxu0 0.0
    %1800 = vmatprep.subr.mxu0 0.0
    %1801 = vmatpush1.msra.mxu0 0.0
    %1802 = vmatprep.subr.mxu0 0.0
    %1803 = vmatpush1.msra.mxu0 0.0
    %1804 = vmatprep.subr.mxu0 0.0
    %1805 = vmatpush1.msra.mxu0 0.0
    %1806 = vmatprep.subr.mxu0 0.0
    %1807 = vmatpush1.msra.mxu0 0.0
    %1808 = vmatprep.subr.mxu0 0.0
    %1809 = vmatpush1.msra.mxu0 0.0
    %1810 = vmatprep.subr.mxu0 0.0
    %1811 = vmatpush1.msra.mxu0 0.0
    %1812 = vmatprep.subr.mxu0 0.0
    %1813 = vmatpush1.msra.mxu0 0.0
    %1814 = vmatprep.subr.mxu0 0.0
    %1815 = vmatpush1.msra.mxu0 0.0
    %1816 = vmatprep.subr.mxu0 0.0
    %1817 = vmatpush1.msra.mxu0 0.0
    %1818 = vmatprep.subr.mxu0 0.0
    %1819 = vmatpush1.msra.mxu0 0.0
    %1820 = vmatprep.subr.mxu0 0.0
    %1821 = vmatpush1.msra.mxu0 0.0
    %1822 = vmatprep.subr.mxu0 0.0
    %1823 = vmatpush1.msra.mxu0 0.0
    %1824 = vmatprep.subr.mxu0 0.0
    %1825 = vmatpush1.msra.mxu0 0.0
    %1826 = vmatprep.subr.mxu0 0.0
    %1827 = vmatpush1.msra.mxu0 0.0
    %1828 = vmatprep.subr.mxu0 0.0
    %1829 = vmatpush1.msra.mxu0 0.0
    %1830 = vmatprep.subr.mxu0 0.0
    %1831 = vmatpush1.msra.mxu0 0.0
    %1832 = vmatprep.subr.mxu0 0.0
    %1833 = vmatpush1.msra.mxu0 0.0
    %1834 = vmatprep.subr.mxu0 0.0
    %1835 = vmatpush1.msra.mxu0 0.0
    %1836 = vmatprep.subr.mxu0 0.0
    %1837 = vmatpush1.msra.mxu0 0.0
    %1838 = vmatprep.subr.mxu0 0.0
    %1839 = vmatpush1.msra.mxu0 0.0
    %1840 = vmatprep.subr.mxu0 0.0
    %1841 = vmatpush1.msra.mxu0 0.0
    %1842 = vmatprep.subr.mxu0 0.0
    %1843 = vmatpush1.msra.mxu0 0.0
    %1844 = vmatprep.mubr.f32.mxu0 0.0
    %1845 = vmatmul.mubr.f32.gmra.mrb[0].mxu0 %v1775
    %v1846 = vpop.f32.mrb[0].mxu0
    %v1847 = vadd.f32 0.0, %v1846
    %v1848 = vpop.f32.mrb[0].mxu0
    %1849 = vmatprep.mubr.f32.mxu0 0.0
    %1850 = vmatmul.mubr.f32.gmra.mrb[0].mxu0 %v1778
    %v1851 = vpop.f32.mrb[0].mxu0
    %v1852 = vadd.f32 0.0, %v1851
    %v1853 = vpop.f32.mrb[0].mxu0
    %1854 = vdwg.mxu0
    %v1855 = vadd.f32 %v1435, %v1847
    %v1856 = vadd.f32 %v1436, %v1852
    %1858 = vrot.lane.b32.xlu0 %v93, 32
    %v1859 = vpop.permute.xlu0 %1858
    %v1861 = vadd.f32 %v1855, %v1859
    %v1862 = vadd.f32 %v1856, %v1859
    %v1863 = vadd.f32 %v44, %v1861
    %v1864 = vadd.f32 %v45, %v1862
    %v1865 = vsel %vm46, %v1863, 0.0
    %1866 = vadd.xlane.f32.xlu0 %v1865
    %v1867 = vpop.xlane.xlu0 %1866
    %v1868 = vsel %vm46, %v1864, 0.0
    %1869 = vadd.xlane.f32.xlu0 %v1868
    %v1870 = vpop.xlane.xlu0 %1869
    %v1871 = vmul.f32 %v1867, %v53
    %v1872 = vmul.f32 %v1870, %v53
    %v1873 = vsub.f32 %v1863, %v1871
    %v1874 = vsub.f32 %v1864, %v1872
    %v1875 = vmul.f32 %v1873, %v1873
    %v1876 = vmul.f32 %v1874, %v1874
    %v1877 = vsel %vm46, %v1875, 0.0
    %1878 = vadd.xlane.f32.xlu0 %v1877
    %v1879 = vpop.xlane.xlu0 %1878
    %v1880 = vsel %vm46, %v1876, 0.0
    %1881 = vadd.xlane.f32.xlu0 %v1880
    %v1882 = vpop.xlane.xlu0 %1881
    %v1883 = vmul.f32 %v1879, %v53
    %v1884 = vmul.f32 %v1882, %v53
    %v1885 = vadd.f32 %v1883, 1e-05
    %v1886 = vadd.f32 %v1884, 1e-05
    %v1887 = vrsqrt.pop %v1885
    %v1888 = vrsqrt.pop %v1886
    %v1889 = vmul.f32 %v1873, %v1887
    %v1890 = vmul.f32 %v1874, %v1888
    %1891 = vrot.lane.b32.xlu0 %v77, 64
    %v1892 = vpop.permute.xlu0 %1891
    %v1894 = vmul.f32 %v1889, %v1892
    %v1895 = vmul.f32 %v1890, %v1892
    %1896 = vrot.lane.b32.xlu0 %v77, 32
    %v1897 = vpop.permute.xlu0 %1896
    %v1899 = vadd.f32 %v1894, %v1897
    %v1900 = vadd.f32 %v1895, %v1897
    %v1901 = vld [vmem:[#allocation5 + $0x28] sm:$0xff]
    %v1902 = vld [vmem:[#allocation5 + $0x30] sm:$0xff]
    %v1903 = vld [vmem:[#allocation5 + $0x38] sm:$0xff]
    %v1904 = vld [vmem:[#allocation5 + $0x40] sm:$0xff]
    %v1905 = vlaneseq
    %v1906 = vshrl.u32 %v1905, 7
    %v1907 = vsub.s32 0, %v1906
    %v1908 = vrot.slane %v42, %v1907
    %v1910 = vsel %vm46, %v1899, 0
    %v1913 = vsel %vm46, %v1900, 0
    %1915 = vmatprep.subr.mxu0 0.0
    %1916 = vmatpush1.msra.mxu0 %v1901
    %1917 = vmatprep.subr.mxu0 0.0
    %1918 = vmatpush1.msra.mxu0 %v1902
    %1919 = vmatprep.subr.mxu0 0.0
    %1920 = vmatpush1.msra.mxu0 %v1903
    %1921 = vmatprep.subr.mxu0 0.0
    %1922 = vmatpush1.msra.mxu0 %v1904
    %1923 = vmatprep.subr.mxu0 0.0
    %1924 = vmatpush1.msra.mxu0 0.0
    %1925 = vmatprep.subr.mxu0 0.0
    %1926 = vmatpush1.msra.mxu0 0.0
    %1927 = vmatprep.subr.mxu0 0.0
    %1928 = vmatpush1.msra.mxu0 0.0
    %1929 = vmatprep.subr.mxu0 0.0
    %1930 = vmatpush1.msra.mxu0 0.0
    %1931 = vmatprep.subr.mxu0 0.0
    %1932 = vmatpush1.msra.mxu0 0.0
    %1933 = vmatprep.subr.mxu0 0.0
    %1934 = vmatpush1.msra.mxu0 0.0
    %1935 = vmatprep.subr.mxu0 0.0
    %1936 = vmatpush1.msra.mxu0 0.0
    %1937 = vmatprep.subr.mxu0 0.0
    %1938 = vmatpush1.msra.mxu0 0.0
    %1939 = vmatprep.subr.mxu0 0.0
    %1940 = vmatpush1.msra.mxu0 0.0
    %1941 = vmatprep.subr.mxu0 0.0
    %1942 = vmatpush1.msra.mxu0 0.0
    %1943 = vmatprep.subr.mxu0 0.0
    %1944 = vmatpush1.msra.mxu0 0.0
    %1945 = vmatprep.subr.mxu0 0.0
    %1946 = vmatpush1.msra.mxu0 0.0
    %1947 = vmatprep.subr.mxu0 0.0
    %1948 = vmatpush1.msra.mxu0 0.0
    %1949 = vmatprep.subr.mxu0 0.0
    %1950 = vmatpush1.msra.mxu0 0.0
    %1951 = vmatprep.subr.mxu0 0.0
    %1952 = vmatpush1.msra.mxu0 0.0
    %1953 = vmatprep.subr.mxu0 0.0
    %1954 = vmatpush1.msra.mxu0 0.0
    %1955 = vmatprep.subr.mxu0 0.0
    %1956 = vmatpush1.msra.mxu0 0.0
    %1957 = vmatprep.subr.mxu0 0.0
    %1958 = vmatpush1.msra.mxu0 0.0
    %1959 = vmatprep.subr.mxu0 0.0
    %1960 = vmatpush1.msra.mxu0 0.0
    %1961 = vmatprep.subr.mxu0 0.0
    %1962 = vmatpush1.msra.mxu0 0.0
    %1963 = vmatprep.subr.mxu0 0.0
    %1964 = vmatpush1.msra.mxu0 0.0
    %1965 = vmatprep.subr.mxu0 0.0
    %1966 = vmatpush1.msra.mxu0 0.0
    %1967 = vmatprep.subr.mxu0 0.0
    %1968 = vmatpush1.msra.mxu0 0.0
    %1969 = vmatprep.subr.mxu0 0.0
    %1970 = vmatpush1.msra.mxu0 0.0
    %1971 = vmatprep.subr.mxu0 0.0
    %1972 = vmatpush1.msra.mxu0 0.0
    %1973 = vmatprep.subr.mxu0 0.0
    %1974 = vmatpush1.msra.mxu0 0.0
    %1975 = vmatprep.subr.mxu0 0.0
    %1976 = vmatpush1.msra.mxu0 0.0
    %1977 = vmatprep.subr.mxu0 0.0
    %1978 = vmatpush1.msra.mxu0 0.0
    %1979 = vmatprep.mubr.f32.mxu0 0.0
    %1980 = vmatmul.mubr.f32.gmra.mrb[0].mxu0 %v1910
    %v1981 = vpop.f32.mrb[0].mxu0
    %v1982 = vadd.f32 %v1908, %v1981
    %v1983 = vpop.f32.mrb[0].mxu0
    %1984 = vmatprep.mubr.f32.mxu0 0.0
    %1985 = vmatmul.mubr.f32.gmra.mrb[0].mxu0 %v1913
    %v1986 = vpop.f32.mrb[0].mxu0
    %v1987 = vadd.f32 %v1908, %v1986
    %v1988 = vpop.f32.mrb[0].mxu0
    %1989 = vdwg.mxu0
    %v1990 = vmax.f32 %v1982, 0.0
    %v1991 = vmax.f32 %v1987, 0.0
    %v1992 = vld [vmem:[#allocation5 + $0x48] sm:$0xff]
    %v1993 = vld [vmem:[#allocation5 + $0x50] sm:$0xff]
    %v1994 = vld [vmem:[#allocation5 + $0x58] sm:$0xff]
    %v1995 = vld [vmem:[#allocation5 + $0x60] sm:$0xff]
    %v1996 = vld [vmem:[#allocation5 + $0x68] sm:$0xff]
    %v1997 = vld [vmem:[#allocation5 + $0x70] sm:$0xff]
    %v1998 = vld [vmem:[#allocation5 + $0x78] sm:$0xff]
    %v1999 = vld [vmem:[#allocation5 + $0x80] sm:$0xff]
    %v2000 = vld [vmem:[#allocation5 + $0x88] sm:$0xff]
    %v2001 = vld [vmem:[#allocation5 + $0x90] sm:$0xff]
    %v2002 = vld [vmem:[#allocation5 + $0x98] sm:$0xff]
    %v2003 = vld [vmem:[#allocation5 + $0xa0] sm:$0xff]
    %v2004 = vld [vmem:[#allocation5 + $0xa8] sm:$0xff]
    %v2005 = vld [vmem:[#allocation5 + $0xb0] sm:$0xff]
    %v2006 = vld [vmem:[#allocation5 + $0xb8] sm:$0xff]
    %v2007 = vld [vmem:[#allocation5 + $0xc0] sm:$0xff]
    %v2008 = vlaneseq
    %v2009 = vshrl.u32 %v2008, 7
    %v2010 = vsub.s32 0, %v2009
    %v2011 = vrot.slane %v43, %v2010
    %2012 = vmatprep.subr.mxu0 0.0
    %2013 = vmatpush1.msra.mxu0 %v1992
    %2014 = vmatprep.subr.mxu0 0.0
    %2015 = vmatpush1.msra.mxu0 %v1993
    %2016 = vmatprep.subr.mxu0 0.0
    %2017 = vmatpush1.msra.mxu0 %v1994
    %2018 = vmatprep.subr.mxu0 0.0
    %2019 = vmatpush1.msra.mxu0 %v1995
    %2020 = vmatprep.subr.mxu0 0.0
    %2021 = vmatpush1.msra.mxu0 %v1996
    %2022 = vmatprep.subr.mxu0 0.0
    %2023 = vmatpush1.msra.mxu0 %v1997
    %2024 = vmatprep.subr.mxu0 0.0
    %2025 = vmatpush1.msra.mxu0 %v1998
    %2026 = vmatprep.subr.mxu0 0.0
    %2027 = vmatpush1.msra.mxu0 %v1999
    %2028 = vmatprep.subr.mxu0 0.0
    %2029 = vmatpush1.msra.mxu0 %v2000
    %2030 = vmatprep.subr.mxu0 0.0
    %2031 = vmatpush1.msra.mxu0 %v2001
    %2032 = vmatprep.subr.mxu0 0.0
    %2033 = vmatpush1.msra.mxu0 %v2002
    %2034 = vmatprep.subr.mxu0 0.0
    %2035 = vmatpush1.msra.mxu0 %v2003
    %2036 = vmatprep.subr.mxu0 0.0
    %2037 = vmatpush1.msra.mxu0 %v2004
    %2038 = vmatprep.subr.mxu0 0.0
    %2039 = vmatpush1.msra.mxu0 %v2005
    %2040 = vmatprep.subr.mxu0 0.0
    %2041 = vmatpush1.msra.mxu0 %v2006
    %2042 = vmatprep.subr.mxu0 0.0
    %2043 = vmatpush1.msra.mxu0 %v2007
    %2044 = vmatprep.subr.mxu0 0.0
    %2045 = vmatpush1.msra.mxu0 0.0
    %2046 = vmatprep.subr.mxu0 0.0
    %2047 = vmatpush1.msra.mxu0 0.0
    %2048 = vmatprep.subr.mxu0 0.0
    %2049 = vmatpush1.msra.mxu0 0.0
    %2050 = vmatprep.subr.mxu0 0.0
    %2051 = vmatpush1.msra.mxu0 0.0
    %2052 = vmatprep.subr.mxu0 0.0
    %2053 = vmatpush1.msra.mxu0 0.0
    %2054 = vmatprep.subr.mxu0 0.0
    %2055 = vmatpush1.msra.mxu0 0.0
    %2056 = vmatprep.subr.mxu0 0.0
    %2057 = vmatpush1.msra.mxu0 0.0
    %2058 = vmatprep.subr.mxu0 0.0
    %2059 = vmatpush1.msra.mxu0 0.0
    %2060 = vmatprep.subr.mxu0 0.0
    %2061 = vmatpush1.msra.mxu0 0.0
    %2062 = vmatprep.subr.mxu0 0.0
    %2063 = vmatpush1.msra.mxu0 0.0
    %2064 = vmatprep.subr.mxu0 0.0
    %2065 = vmatpush1.msra.mxu0 0.0
    %2066 = vmatprep.subr.mxu0 0.0
    %2067 = vmatpush1.msra.mxu0 0.0
    %2068 = vmatprep.subr.mxu0 0.0
    %2069 = vmatpush1.msra.mxu0 0.0
    %2070 = vmatprep.subr.mxu0 0.0
    %2071 = vmatpush1.msra.mxu0 0.0
    %2072 = vmatprep.subr.mxu0 0.0
    %2073 = vmatpush1.msra.mxu0 0.0
    %2074 = vmatprep.subr.mxu0 0.0
    %2075 = vmatpush1.msra.mxu0 0.0
    %2076 = vmatprep.mubr.f32.mxu0 0.0
    %2077 = vmatmul.mubr.f32.gmra.mrb[0].mxu0 %v1990
    %v2078 = vpop.f32.mrb[0].mxu0
    %v2079 = vadd.f32 %v2011, %v2078
    %v2080 = vpop.f32.mrb[0].mxu0
    %2081 = vmatprep.mubr.f32.mxu0 0.0
    %2082 = vmatmul.mubr.f32.gmra.mrb[0].mxu0 %v1991
    %v2083 = vpop.f32.mrb[0].mxu0
    %v2084 = vadd.f32 %v2011, %v2083
    %v2085 = vpop.f32.mrb[0].mxu0
    %2086 = vdwg.mxu0
    %v2087 = vadd.f32 %v1863, %v2079
    %v2088 = vadd.f32 %v1864, %v2084
    %2089 = vst.msk [vmem:[#allocation7] sm:$0xff] %vm46, %v2087
    %2090 = vst.msk [vmem:[#allocation7 + $0x8] sm:$0xff] %vm46, %v2088
    // Predicated region
    $region18: #{tpu_custom_call.1} parent=1 // pred_check
      _
    $region19: #{tpu_custom_call.1} parent=1 // pred_check_branch
      %2092 = sbr.rel (0) target = $region21
    $region20: #{tpu_custom_call.1} parent=1 // pred_region
      %s2094 = ssub.s32 256, 256
      %2095 = vsyncadd [#allocation4], %s2094
      %s2096 = sshll.u32 [#allocation7], 4
      %s2097 = int_to_ptr.vmem [resolvable:$true] %s2096
      %2102 = dma.vmem_to_hbm [thread:$0]  %s2097, 256, %s2, [#allocation4], 128, 128, 8
    $region21: #{tpu_custom_call.1} parent=1 // pred_fallthru
      _
    // Predicated region
    $region22: #{tpu_custom_call.1} parent=1 // pred_check
      _
    $region23: #{tpu_custom_call.1} parent=1 // pred_check_branch
      %2104 = sbr.rel (0) target = $region25
    $region24: #{tpu_custom_call.1} parent=1 // pred_region
      %2105 = dma.done [#allocation4], 256
    $region25: #{tpu_custom_call.1} parent=1 // pred_fallthru
      _
    %2106 = vsyncpa [#allocation3], 1
    %2107 = vsyncpa [#allocation6], 1
    %2108 = vsyncpa [#allocation4], 1

</llo_original>
